<compile_context>
chip_gen: v7x
topology: tpu7x:2x2x1
jax: 0.10.0
libtpu: 0.0.40
codegen_flags: <defaults>
</compile_context>

<pallas_src>
import math
from functools import partial

import jax
import jax.numpy as jnp
from jax.experimental import pallas as pl
from jax.experimental.pallas import tpu as pltpu

SIGMA_DATA = 0.5   # KDiffusion sigma_data
RHO = 1.0          # ADPM2Sampler rho (default)


# ----------------------------------------------------------------------------
# Shared math (used both inside the kernel and by the pure-JAX reference so the
# two paths execute the identical op sequence).
# ----------------------------------------------------------------------------
def _denoise(x, w1, hidden_bias, w2, b2, c_skip, c_out, c_in):
    """KDiffusion.denoise_fn with a synthetic pointwise MLP net.

    net(x_scaled) = tanh(x_scaled @ W1 + (b1 + c_noise*temb)) @ W2 + b2
    x: (M, C) f32; w1/w2: bf16; f32 accumulation and elementwise math.
    """
    h = jnp.dot((c_in * x).astype(jnp.bfloat16), w1,
                preferred_element_type=jnp.float32)
    h = jnp.tanh(h + hidden_bias)
    x_pred = jnp.dot(h.astype(jnp.bfloat16), w2,
                     preferred_element_type=jnp.float32) + b2
    return c_skip * x + c_out * x_pred


def _scale_weights(sigma):
    """KDiffusion.get_scale_weights (vectorized over steps)."""
    sd = SIGMA_DATA
    c_noise = jnp.log(sigma) * 0.25
    c_skip = sd * sd / (sigma * sigma + sd * sd)
    c_out = sigma * sd * jax.lax.rsqrt(sigma * sigma + sd * sd)
    c_in = jax.lax.rsqrt(sigma * sigma + sd * sd)
    return c_skip, c_out, c_in, c_noise


def _sigma_tables(sigmas, b1, temb, rho=RHO):
    """Precompute every per-step scalar / small-vector the kernel needs.

    Returns:
      tbl:      (n_iters, 9) f32 -> SMEM via scalar prefetch
                cols: sigma_up, ratio_mid, ratio_down,
                      c_skip, c_out, c_in        (at sigma)
                      c_skip_m, c_out_m, c_in_m  (at sigma_mid)
      bias_tbl: (n_iters, 2, H) f32, [step, 0/1, :] = b1 + c_noise{,_mid} * temb
    """
    sigma = sigmas[:-1]
    sigma_next = sigmas[1:]
    # Clamp tiny negatives from fp rounding before the sqrt (NaN guard).
    sigma_up = jnp.sqrt(jnp.maximum(
        sigma_next ** 2 * (sigma ** 2 - sigma_next ** 2) / (sigma ** 2), 0.0))
    sigma_down = jnp.sqrt(jnp.maximum(sigma_next ** 2 - sigma_up ** 2, 0.0))
    sigma_mid = ((sigma ** (1.0 / rho) + sigma_down ** (1.0 / rho)) / 2.0) ** rho

    ratio_mid = (sigma_mid - sigma) / sigma        # fused (sigma_mid-sigma)/sigma
    ratio_down = (sigma_down - sigma) / sigma_mid  # fused (sigma_down-sigma)/sigma_mid

    c_skip, c_out, c_in, c_noise = _scale_weights(sigma)
    c_skip_m, c_out_m, c_in_m, c_noise_m = _scale_weights(sigma_mid)

    tbl = jnp.stack([sigma_up, ratio_mid, ratio_down,
                     c_skip, c_out, c_in,
                     c_skip_m, c_out_m, c_in_m], axis=1).astype(jnp.float32)

    bias_sig = b1 + c_noise[:, None] * temb        # (n_iters, H)
    bias_mid = b1 + c_noise_m[:, None] * temb      # (n_iters, H)
    bias_tbl = jnp.stack([bias_sig, bias_mid], axis=1).astype(jnp.float32)
    return tbl, bias_tbl


# ----------------------------------------------------------------------------
# Kernel: one ADPM2 step for one row tile.  Grid = (row_tiles, n_iters), the
# step axis is innermost/"arbitrary"; the state x is the resident output block.
# ----------------------------------------------------------------------------
def adpm2_step_kernel(tbl_ref, x0_ref, noise_ref, bias_ref,
                      w1_ref, w2_ref, b2_ref, o_ref):
    s = pl.program_id(1)

    # x = sigmas[0] * noise was folded into x0 in the wrapper.
    @pl.when(s == 0)
    def _():
        o_ref[...] = x0_ref[...]

    x = o_ref[...]                 # (row_tile, C) f32, resident across step axis
    w1 = w1_ref[...]               # (C, H) bf16
    w2 = w2_ref[...]               # (H, C) bf16
    b2 = b2_ref[...]               # (1, C) f32
    bias = bias_ref[0]             # (2, H) f32: precombined b1 + c_noise*temb
    hb_sig = bias[0:1, :]
    hb_mid = bias[1:2, :]

    sigma_up = tbl_ref[s, 0]
    ratio_mid = tbl_ref[s, 1]      # (sigma_mid  - sigma) / sigma
    ratio_down = tbl_ref[s, 2]     # (sigma_down - sigma) / sigma_mid

    # ADPM2Sampler.step (fn = KDiffusion.denoise_fn)
    den = _denoise(x, w1, hb_sig, w2, b2,
                   tbl_ref[s, 3], tbl_ref[s, 4], tbl_ref[s, 5])
    x_mid = x + (x - den) * ratio_mid
    den_mid = _denoise(x_mid, w1, hb_mid, w2, b2,
                       tbl_ref[s, 6], tbl_ref[s, 7], tbl_ref[s, 8])
    x = x + (x_mid - den_mid) * ratio_down
    # randn_like(x) * sigma_up ; noise shipped bf16, upcast at the add.
    o_ref[...] = x + noise_ref[0].astype(jnp.float32) * sigma_up


# ----------------------------------------------------------------------------
# Wrapper: ADPM2Sampler.forward
# ----------------------------------------------------------------------------
def _pick_row_tile(M, requested):
    """Largest multiple-of-8 divisor of M that is <= requested, preferring a
    choice that leaves >= 2 row tiles (v7x megacore)."""
    requested = max(8, min(requested, M))
    start = (requested // 8) * 8
    fallback = None
    for t in range(start, 7, -8):
        if M % t == 0:
            if M // t >= 2:
                return t
            if fallback is None:
                fallback = t
    return fallback if fallback is not None else M


def adpm2_sample(noise_ncw, sigmas, step_noise, params, *, row_tile=1024):
    """noise_ncw: (B, C, T); step_noise: (num_steps-1, B*T, C); returns (B, C, T)."""
    B, C, T = noise_ncw.shape
    H = params["w1"].shape[1]
    M = B * T
    n_iters = int(sigmas.shape[0]) - 1
    assert n_iters >= 1

    row_tile = _pick_row_tile(M, row_tile)
    assert M % row_tile == 0

    sigmas = sigmas.astype(jnp.float32)
    # x0 = sigmas[0] * noise, flattened channels-last (lane-dense).
    x0 = (sigmas[0] * jnp.transpose(noise_ncw, (0, 2, 1)).astype(jnp.float32)
          ).reshape(M, C)

    b1 = params["b1"].astype(jnp.float32)
    temb = params["temb"].astype(jnp.float32)
    tbl, bias_tbl = _sigma_tables(sigmas, b1, temb)      # (n_iters,9), (n_iters,2,H)

    step_noise = step_noise.astype(jnp.bfloat16)         # halve the HBM noise stream
    w1 = params["w1"].astype(jnp.bfloat16)
    w2 = params["w2"].astype(jnp.bfloat16)
    b2 = params["b2"].astype(jnp.float32)

    # VMEM budget: double-buffered blocks + live temporaries; independent of n_iters.
    f32b, bf16b = 4, 2
    per_block_set = (row_tile * C * f32b            # x0 block
                     + row_tile * C * bf16b         # per-step noise block (bf16)
                     + 2 * H * f32b                 # hidden-bias block
                     + 2 * C * H * bf16b            # w1, w2
                     + C * f32b                     # b2
                     + row_tile * C * f32b)         # output (state) block
    vmem_needed = 2 * per_block_set + 6 * row_tile * max(C, H) * f32b
    try:
        vmem_cap = int(pltpu.get_tpu_info().vmem_capacity_bytes)
    except Exception:
        vmem_cap = 64 << 20
    vmem_limit = int(min(max(vmem_needed, 16 << 20), max(vmem_cap // 2, 16 << 20)))

    out_flat = pl.pallas_call(
        adpm2_step_kernel,
        out_shape=jax.ShapeDtypeStruct((M, C), jnp.float32),
        grid_spec=pltpu.PrefetchScalarGridSpec(
            num_scalar_prefetch=1,                  # per-step scalar table -> SMEM
            grid=(M // row_tile, n_iters),          # step axis last (innermost)
            in_specs=[
                pl.BlockSpec((row_tile, C), lambda m, s, tbl: (m, 0)),        # x0
                pl.BlockSpec((1, row_tile, C), lambda m, s, tbl: (s, m, 0)),  # step randn (bf16)
                pl.BlockSpec((1, 2, H), lambda m, s, tbl: (s, 0, 0)),         # hidden bias
                pl.BlockSpec((C, H), lambda m, s, tbl: (0, 0)),               # w1 (bf16)
                pl.BlockSpec((H, C), lambda m, s, tbl: (0, 0)),               # w2 (bf16)
                pl.BlockSpec((1, C), lambda m, s, tbl: (0, 0)),               # b2
            ],
            out_specs=pl.BlockSpec((row_tile, C), lambda m, s, tbl: (m, 0)),
        ),
        compiler_params=pltpu.CompilerParams(
            dimension_semantics=("parallel", "arbitrary"),
            vmem_limit_bytes=vmem_limit),
    )(tbl, x0, step_noise, bias_tbl, w1, w2, b2)

    return jnp.transpose(out_flat.reshape(B, T, C), (0, 2, 1))


# ----------------------------------------------------------------------------
# Pure-JAX mirror of the PyTorch forward (for validation).  Uses the identical
# precomputed coefficient tables and _denoise() op order as the kernel; the
# ratio form is algebraically identical to the PyTorch divide-based step.
# ----------------------------------------------------------------------------
def adpm2_reference(noise_ncw, sigmas, step_noise, params):
    B, C, T = noise_ncw.shape
    M = B * T
    sigmas = sigmas.astype(jnp.float32)
    b1 = params["b1"].astype(jnp.float32)
    temb = params["temb"].astype(jnp.float32)
    tbl, bias_tbl = _sigma_tables(sigmas, b1, temb)

    x = (sigmas[0] * jnp.transpose(noise_ncw, (0, 2, 1)).astype(jnp.float32)
         ).reshape(M, C)
    w1 = params["w1"].astype(jnp.bfloat16)
    w2 = params["w2"].astype(jnp.bfloat16)
    b2 = params["b2"].astype(jnp.float32)
    noise = step_noise.astype(jnp.bfloat16).astype(jnp.float32)

    for i in range(int(sigmas.shape[0]) - 1):
        hb_sig = bias_tbl[i, 0:1, :]
        hb_mid = bias_tbl[i, 1:2, :]
        den = _denoise(x, w1, hb_sig, w2, b2, tbl[i, 3], tbl[i, 4], tbl[i, 5])
        x_mid = x + (x - den) * tbl[i, 1]
        den_mid = _denoise(x_mid, w1, hb_mid, w2, b2,
                           tbl[i, 6], tbl[i, 7], tbl[i, 8])
        x = x + (x_mid - den_mid) * tbl[i, 2]
        x = x + noise[i] * tbl[i, 0]
    return jnp.transpose(x.reshape(B, T, C), (0, 2, 1))


if __name__ == "__main__":
    # Lane-aligned small shapes: C = H = 128 (lane axis), B*T = 512 rows.
    B, C, T, H = 2, 128, 256, 128
    num_steps = 5
    n_iters = num_steps - 1

    key = jax.random.PRNGKey(0)
    k_noise, k_step, k_w1, k_b1, k_temb, k_w2, k_b2 = jax.random.split(key, 7)

    noise = jax.random.normal(k_noise, (B, C, T), jnp.float32)                 # NCW input
    step_noise = jax.random.normal(k_step, (n_iters, B * T, C), jnp.float32)   # per-step randn
    # Karras-style decreasing sigma schedule ending at 0.
    sigmas = jnp.array([1.0, 0.6, 0.35, 0.15, 0.0], jnp.float32)

    params = {
        "w1": jax.random.normal(k_w1, (C, H), jnp.float32) / math.sqrt(C),
        "b1": jax.random.normal(k_b1, (1, H), jnp.float32) * 0.1,
        "temb": jax.random.normal(k_temb, (1, H), jnp.float32) * 0.1,
        "w2": jax.random.normal(k_w2, (H, C), jnp.float32) / math.sqrt(H),
        "b2": jax.random.normal(k_b2, (1, C), jnp.float32) * 0.1,
    }

    out = adpm2_sample(noise, sigmas, step_noise, params)
    out = jax.block_until_ready(out)

    ref = adpm2_reference(noise, sigmas, step_noise, params)
    assert out.shape == (B, C, T)
    # Tolerance covers bf16 MXU matmuls + EUP-vs-XLA tanh differences accumulated
    # over 2*(num_steps-1) denoiser evaluations (observed max diff ~1.3e-3).
    max_diff = jnp.max(jnp.abs(out - ref))
    assert jnp.allclose(out, ref, atol=1e-2, rtol=1e-2), (
        f"mismatch: max abs diff {max_diff}")

    print("KERNEL_OK")
</pallas_src>

<mosaic_0001>
module attributes {stable_mosaic.version = 11 : i64} {
  func.func @adpm2_step_kernel(%arg0: i32, %arg1: i32, %arg2: memref<4x9xf32, #tpu.memory_space<smem>>, %arg3: memref<256x128xf32, #tpu.memory_space<vmem>>, %arg4: memref<1x256x128xbf16, #tpu.memory_space<vmem>>, %arg5: memref<1x2x128xf32, #tpu.memory_space<vmem>>, %arg6: memref<128x128xbf16, #tpu.memory_space<vmem>>, %arg7: memref<128x128xbf16, #tpu.memory_space<vmem>>, %arg8: memref<1x128xf32, #tpu.memory_space<vmem>>, %arg9: memref<256x128xf32, #tpu.memory_space<vmem>>) attributes {dimension_semantics = [#tpu.dimension_semantics<parallel>, #tpu.dimension_semantics<arbitrary>], iteration_bounds = array<i64: 2, 4>, scalar_prefetch = 1 : i64, scratch_operands = 0 : i64, tpu.core_type = #tpu.core_type<tc>, window_params = [{transform_indices = @transform_0, window_bounds = array<i64: 256, 128>}, {transform_indices = @transform_1, window_bounds = array<i64: 1, 256, 128>}, {transform_indices = @transform_2, window_bounds = array<i64: 1, 2, 128>}, {pipeline_mode = #tpu.pipeline_mode<synchronous>, transform_indices = @transform_3, window_bounds = array<i64: 128, 128>}, {pipeline_mode = #tpu.pipeline_mode<synchronous>, transform_indices = @transform_4, window_bounds = array<i64: 128, 128>}, {pipeline_mode = #tpu.pipeline_mode<synchronous>, transform_indices = @transform_5, window_bounds = array<i64: 1, 128>}, {transform_indices = @transform_6, window_bounds = array<i64: 256, 128>}]} {
    %c0_i32 = arith.constant 0 : i32
    %0 = arith.cmpi eq, %arg1, %c0_i32 : i32
    %1 = arith.extui %0 : i1 to i32
    %c0_i32_0 = arith.constant 0 : i32
    %2 = arith.cmpi ne, %1, %c0_i32_0 : i32
    scf.if %2 {
      %c0_20 = arith.constant 0 : index
      %c0_21 = arith.constant 0 : index
      %76 = vector.load %arg3[%c0_20, %c0_21] : memref<256x128xf32, #tpu.memory_space<vmem>>, vector<256x128xf32>
      %c0_22 = arith.constant 0 : index
      %c0_23 = arith.constant 0 : index
      %77 = vector.load %arg9[%c0_22, %c0_23] : memref<256x128xf32, #tpu.memory_space<vmem>>, vector<256x128xf32>
      tpu.vector_store %arg9[%c0_22, %c0_23], %76 {strides = array<i32>} : memref<256x128xf32, #tpu.memory_space<vmem>>, vector<256x128xf32>,
    } else {
    }
    %c0 = arith.constant 0 : index
    %c0_1 = arith.constant 0 : index
    %3 = vector.load %arg9[%c0, %c0_1] : memref<256x128xf32, #tpu.memory_space<vmem>>, vector<256x128xf32>
    %c0_2 = arith.constant 0 : index
    %c0_3 = arith.constant 0 : index
    %4 = vector.load %arg6[%c0_2, %c0_3] : memref<128x128xbf16, #tpu.memory_space<vmem>>, vector<128x128xbf16>
    %c0_4 = arith.constant 0 : index
    %c0_5 = arith.constant 0 : index
    %5 = vector.load %arg7[%c0_4, %c0_5] : memref<128x128xbf16, #tpu.memory_space<vmem>>, vector<128x128xbf16>
    %c0_6 = arith.constant 0 : index
    %c0_7 = arith.constant 0 : index
    %6 = vector.load %arg8[%c0_6, %c0_7] : memref<1x128xf32, #tpu.memory_space<vmem>>, vector<1x128xf32>
    %c0_8 = arith.constant 0 : index
    %c0_9 = arith.constant 0 : index
    %c0_10 = arith.constant 0 : index
    %7 = vector.load %arg5[%c0_8, %c0_9, %c0_10] : memref<1x2x128xf32, #tpu.memory_space<vmem>>, vector<1x2x128xf32>
    %8 = vector.shape_cast %7 : vector<1x2x128xf32> to vector<2x128xf32>
    %9 = vector.extract_strided_slice %8 {offsets = [0, 0], sizes = [1, 128], strides = [1, 1]} : vector<2x128xf32> to vector<1x128xf32>
    %10 = vector.extract_strided_slice %8 {offsets = [1, 0], sizes = [1, 128], strides = [1, 1]} : vector<2x128xf32> to vector<1x128xf32>
    %11 = arith.index_cast %arg1 : i32 to index
    %c0_11 = arith.constant 0 : index
    %12 = memref.load %arg2[%11, %c0_11] : memref<4x9xf32, #tpu.memory_space<smem>>
    %13 = arith.index_cast %arg1 : i32 to index
    %c1 = arith.constant 1 : index
    %14 = memref.load %arg2[%13, %c1] : memref<4x9xf32, #tpu.memory_space<smem>>
    %15 = arith.index_cast %arg1 : i32 to index
    %c2 = arith.constant 2 : index
    %16 = memref.load %arg2[%15, %c2] : memref<4x9xf32, #tpu.memory_space<smem>>
    %17 = arith.index_cast %arg1 : i32 to index
    %c3 = arith.constant 3 : index
    %18 = memref.load %arg2[%17, %c3] : memref<4x9xf32, #tpu.memory_space<smem>>
    %19 = arith.index_cast %arg1 : i32 to index
    %c4 = arith.constant 4 : index
    %20 = memref.load %arg2[%19, %c4] : memref<4x9xf32, #tpu.memory_space<smem>>
    %21 = arith.index_cast %arg1 : i32 to index
    %c5 = arith.constant 5 : index
    %22 = memref.load %arg2[%21, %c5] : memref<4x9xf32, #tpu.memory_space<smem>>
    %23 = vector.broadcast %22 : f32 to vector<256x128xf32>
    %24 = arith.mulf %23, %3 : vector<256x128xf32>
    %25 = arith.truncf %24 : vector<256x128xf32> to vector<256x128xbf16>
    %cst = arith.constant dense<0.000000e+00> : vector<256x128xf32>
    %26 = tpu.matmul %25, %4, %cst {dimension_numbers = #tpu.dot_dimension_numbers<[1], [0], [0], [1], [0, 0, 1, 1], [], []>} : vector<256x128xbf16>, vector<128x128xbf16>, vector<256x128xf32> -> vector<256x128xf32>
    %27 = vector.broadcast %9 : vector<1x128xf32> to vector<256x128xf32>
    %28 = arith.addf %26, %27 : vector<256x128xf32>
    %29 = math.tanh %28 : vector<256x128xf32>
    %30 = arith.truncf %29 : vector<256x128xf32> to vector<256x128xbf16>
    %cst_12 = arith.constant dense<0.000000e+00> : vector<256x128xf32>
    %31 = tpu.matmul %30, %5, %cst_12 {dimension_numbers = #tpu.dot_dimension_numbers<[1], [0], [0], [1], [0, 0, 1, 1], [], []>} : vector<256x128xbf16>, vector<128x128xbf16>, vector<256x128xf32> -> vector<256x128xf32>
    %32 = vector.broadcast %6 : vector<1x128xf32> to vector<256x128xf32>
    %33 = arith.addf %31, %32 : vector<256x128xf32>
    %34 = vector.broadcast %18 : f32 to vector<256x128xf32>
    %35 = arith.mulf %34, %3 : vector<256x128xf32>
    %36 = vector.broadcast %20 : f32 to vector<256x128xf32>
    %37 = arith.mulf %36, %33 : vector<256x128xf32>
    %38 = arith.addf %35, %37 : vector<256x128xf32>
    %39 = arith.subf %3, %38 : vector<256x128xf32>
    %40 = vector.broadcast %14 : f32 to vector<256x128xf32>
    %41 = arith.mulf %39, %40 : vector<256x128xf32>
    %42 = arith.addf %3, %41 : vector<256x128xf32>
    %43 = arith.index_cast %arg1 : i32 to index
    %c6 = arith.constant 6 : index
    %44 = memref.load %arg2[%43, %c6] : memref<4x9xf32, #tpu.memory_space<smem>>
    %45 = arith.index_cast %arg1 : i32 to index
    %c7 = arith.constant 7 : index
    %46 = memref.load %arg2[%45, %c7] : memref<4x9xf32, #tpu.memory_space<smem>>
    %47 = arith.index_cast %arg1 : i32 to index
    %c8 = arith.constant 8 : index
    %48 = memref.load %arg2[%47, %c8] : memref<4x9xf32, #tpu.memory_space<smem>>
    %49 = vector.broadcast %48 : f32 to vector<256x128xf32>
    %50 = arith.mulf %49, %42 : vector<256x128xf32>
    %51 = arith.truncf %50 : vector<256x128xf32> to vector<256x128xbf16>
    %cst_13 = arith.constant dense<0.000000e+00> : vector<256x128xf32>
    %52 = tpu.matmul %51, %4, %cst_13 {dimension_numbers = #tpu.dot_dimension_numbers<[1], [0], [0], [1], [0, 0, 1, 1], [], []>} : vector<256x128xbf16>, vector<128x128xbf16>, vector<256x128xf32> -> vector<256x128xf32>
    %53 = vector.broadcast %10 : vector<1x128xf32> to vector<256x128xf32>
    %54 = arith.addf %52, %53 : vector<256x128xf32>
    %55 = math.tanh %54 : vector<256x128xf32>
    %56 = arith.truncf %55 : vector<256x128xf32> to vector<256x128xbf16>
    %cst_14 = arith.constant dense<0.000000e+00> : vector<256x128xf32>
    %57 = tpu.matmul %56, %5, %cst_14 {dimension_numbers = #tpu.dot_dimension_numbers<[1], [0], [0], [1], [0, 0, 1, 1], [], []>} : vector<256x128xbf16>, vector<128x128xbf16>, vector<256x128xf32> -> vector<256x128xf32>
    %58 = vector.broadcast %6 : vector<1x128xf32> to vector<256x128xf32>
    %59 = arith.addf %57, %58 : vector<256x128xf32>
    %60 = vector.broadcast %44 : f32 to vector<256x128xf32>
    %61 = arith.mulf %60, %42 : vector<256x128xf32>
    %62 = vector.broadcast %46 : f32 to vector<256x128xf32>
    %63 = arith.mulf %62, %59 : vector<256x128xf32>
    %64 = arith.addf %61, %63 : vector<256x128xf32>
    %65 = arith.subf %42, %64 : vector<256x128xf32>
    %66 = vector.broadcast %16 : f32 to vector<256x128xf32>
    %67 = arith.mulf %65, %66 : vector<256x128xf32>
    %68 = arith.addf %3, %67 : vector<256x128xf32>
    %c0_15 = arith.constant 0 : index
    %c0_16 = arith.constant 0 : index
    %c0_17 = arith.constant 0 : index
    %69 = vector.load %arg4[%c0_15, %c0_16, %c0_17] : memref<1x256x128xbf16, #tpu.memory_space<vmem>>, vector<1x256x128xbf16>
    %70 = vector.shape_cast %69 : vector<1x256x128xbf16> to vector<256x128xbf16>
    %71 = arith.extf %70 : vector<256x128xbf16> to vector<256x128xf32>
    %72 = vector.broadcast %12 : f32 to vector<256x128xf32>
    %73 = arith.mulf %71, %72 : vector<256x128xf32>
    %74 = arith.addf %68, %73 : vector<256x128xf32>
    %c0_18 = arith.constant 0 : index
    %c0_19 = arith.constant 0 : index
    %75 = vector.load %arg9[%c0_18, %c0_19] : memref<256x128xf32, #tpu.memory_space<vmem>>, vector<256x128xf32>
    tpu.vector_store %arg9[%c0_18, %c0_19], %74 {strides = array<i32>} : memref<256x128xf32, #tpu.memory_space<vmem>>, vector<256x128xf32>,
    return
  }
  func.func @transform_0(%arg0: i32, %arg1: i32, %arg2: memref<4x9xf32, #tpu.memory_space<smem>>) -> (i32, i32) {
    %c0_i32 = arith.constant 0 : i32
    %c0_i32_0 = arith.constant 0 : i32
    return %arg0, %c0_i32 : i32, i32
  }
  func.func @transform_1(%arg0: i32, %arg1: i32, %arg2: memref<4x9xf32, #tpu.memory_space<smem>>) -> (i32, i32, i32) {
    %c0_i32 = arith.constant 0 : i32
    %c0_i32_0 = arith.constant 0 : i32
    return %arg1, %arg0, %c0_i32 : i32, i32, i32
  }
  func.func @transform_2(%arg0: i32, %arg1: i32, %arg2: memref<4x9xf32, #tpu.memory_space<smem>>) -> (i32, i32, i32) {
    %c0_i32 = arith.constant 0 : i32
    %c0_i32_0 = arith.constant 0 : i32
    %c0_i32_1 = arith.constant 0 : i32
    return %arg1, %c0_i32, %c0_i32_0 : i32, i32, i32
  }
  func.func @transform_3(%arg0: i32, %arg1: i32, %arg2: memref<4x9xf32, #tpu.memory_space<smem>>) -> (i32, i32) {
    %c0_i32 = arith.constant 0 : i32
    %c0_i32_0 = arith.constant 0 : i32
    %c0_i32_1 = arith.constant 0 : i32
    return %c0_i32, %c0_i32_0 : i32, i32
  }
  func.func @transform_4(%arg0: i32, %arg1: i32, %arg2: memref<4x9xf32, #tpu.memory_space<smem>>) -> (i32, i32) {
    %c0_i32 = arith.constant 0 : i32
    %c0_i32_0 = arith.constant 0 : i32
    %c0_i32_1 = arith.constant 0 : i32
    return %c0_i32, %c0_i32_0 : i32, i32
  }
  func.func @transform_5(%arg0: i32, %arg1: i32, %arg2: memref<4x9xf32, #tpu.memory_space<smem>>) -> (i32, i32) {
    %c0_i32 = arith.constant 0 : i32
    %c0_i32_0 = arith.constant 0 : i32
    %c0_i32_1 = arith.constant 0 : i32
    return %c0_i32, %c0_i32_0 : i32, i32
  }
  func.func @transform_6(%arg0: i32, %arg1: i32, %arg2: memref<4x9xf32, #tpu.memory_space<smem>>) -> (i32, i32) {
    %c0_i32 = arith.constant 0 : i32
    %c0_i32_0 = arith.constant 0 : i32
    return %arg0, %c0_i32 : i32, i32
  }
}

</mosaic_0001>

<llo_original>
// kernel: tpu_custom_call.1
$region0: #{tpu_custom_call.1}
  #allocation0 [shape = 'u32[]', space=smem, size = 0x4, offset = 0x4, fixed_abs, tag = 'smem constant byte address 0x4 - core index']
  #allocation1 [shape = 'u32[144,128]{1,0:T(1,128)}', space=vmem, size = 0x12000, scoped, tag = 'internal scratch']
  #allocation2 [shape = 's32[1]{0}', space=sflag, size = 0x4, scoped, tag = 'scoped memory for tpu_custom_call.1']
  #allocation3 [shape = 'u8[2048]{0}', space=smem, size = 0x800, scoped, tag = 'prefetched SMEM operand 0']
  %s0 = inlined_call_operand.hbm [shape: f32[4,9], index: 0, kind: input, shape index: {}]
  %s1 = inlined_call_operand.hbm [shape: f32[512,128], index: 1, kind: input, shape index: {}]
  %s2 = inlined_call_operand.hbm [shape: bf16[4,512,128], index: 2, kind: input, shape index: {}]
  %s3 = inlined_call_operand.vmem [shape: f32[4,2,128], index: 3, kind: input, shape index: {}]
  %s4 = inlined_call_operand.hbm [shape: bf16[128,128], index: 4, kind: input, shape index: {}]
  %s5 = inlined_call_operand.hbm [shape: bf16[128,128], index: 5, kind: input, shape index: {}]
  %s6 = inlined_call_operand.vmem [shape: f32[1,128], index: 6, kind: input, shape index: {}]
  %s7 = inlined_call_operand.hbm [shape: f32[512,128], index: 7, kind: output, shape index: {}]
  %s8 = sld [smem:[#allocation0]]
  $region77: #{tpu_custom_call.1} parent=0
    _
  %s10 = ssub.s32 1, %s8
  %s11 = scalar_select 0, %s10, %s8
  %13 = dma.hbm_to_smem %s0, 64, [#allocation3], [#allocation2]
  %14 = dma.done [#allocation2], 64
  %15 = sfence
  $region1: #{tpu_custom_call.1} parent=0
    #allocation4 [shape = 'u8[262144]{0}', space=vmem, size = 0x40000, scoped, tag = 'input window, operand 1']
    #allocation5 [shape = 's32[2]{0}', space=sflag, size = 0x8, scoped, tag = 'scoped memory for tpu_custom_call.1']
    #allocation6 [shape = 's32[2]{0}', space=sflag, size = 0x8, scoped, tag = 'scoped memory for tpu_custom_call.1']
    #allocation7 [shape = 'u8[131072]{0}', space=vmem, size = 0x20000, scoped, tag = 'input window, operand 2']
    #allocation8 [shape = 's32[2]{0}', space=sflag, size = 0x8, scoped, tag = 'scoped memory for tpu_custom_call.1']
    #allocation9 [shape = 'u8[32768]{0}', space=vmem, size = 0x8000, scoped, tag = 'input window, operand 4, single buffered']
    #allocation10 [shape = 'u8[32768]{0}', space=vmem, size = 0x8000, scoped, tag = 'input window, operand 5, single buffered']
    #allocation11 [shape = 's32[1]{0}', space=sflag, size = 0x4, scoped, tag = 'scoped memory for tpu_custom_call.1']
    #allocation12 [shape = 'u8[262144]{0}', space=vmem, size = 0x40000, scoped, tag = 'output window, operand 0']
    %16 = vsyncpa [#allocation5], 0
    %s17 = scalar_lea.sflag [#allocation5], 1
    %18 = vsyncpa %s17, 0
    %19 = vsyncpa [#allocation8], 0
    %s20 = scalar_lea.sflag [#allocation8], 1
    %21 = vsyncpa %s20, 0
    %22 = vsyncpa [#allocation11], 0
    %23 = vsyncpa [#allocation6], 0
    %s24 = scalar_lea.sflag [#allocation6], 1
    %25 = vsyncpa %s24, 0
    loop: start=0, step=1, limit=10
    $region2: #{tpu_custom_call.1} parent=1 // loop_pre_header
      _
    $region3: #{tpu_custom_call.1} parent=1 // loop_header
      %s27 = sphi 0, %s31
      %p28 = scmp.ge.s32.totalorder %s27, 10
      %s34 = sphi 0, %s46
      %s35 = sphi 0, %s42
      %s36 = sphi 0, %s34
      %s37 = sphi 0, %s35
      %s38 = sphi 0, %s36
      %s39 = sphi 0, %s37
      %s49 = sphi 0, %s51
      %s52 = sphi 0, %s49
      %s53 = sphi 0, %s52
      %s69 = sphi 0, %s53
      %s77 = sphi 0, %s79
      %s80 = sphi 0, %s77
      %s81 = sphi 0, %s80
      %s97 = sphi 0, %s81
      %s103 = sphi 0, %s105
      %s106 = sphi 0, %s103
      %s107 = sphi 0, %s106
      %s123 = sphi 0, %s107
      %s127 = sphi 0, %s127
      %s129 = sphi 0, %s127
      %s130 = sphi 0, %s129
      %s144 = sphi 0, %s130
      %s148 = sphi 0, %s148
      %s150 = sphi 0, %s148
      %s151 = sphi 0, %s150
      %s165 = sphi 0, %s151
      %s169 = sphi 0, %s169
      %s171 = sphi 0, %s169
      %s172 = sphi 0, %s171
      %s186 = sphi 0, %s172
      %s192 = sphi 0, %s194
      %s195 = sphi 0, %s192
      %s196 = sphi 0, %s195
      %s212 = sphi 0, %s196
    $region4: #{tpu_custom_call.1} parent=1 // loop_header_branch
      %30 = sbr.rel (%p28) target = $region8
    $region5: #{tpu_custom_call.1} parent=1 // loop_body
      %s32 = ssub.s32 %s27, 1
      %s33 = ssub.s32 %s27, 2
      %s40 = sadd.s32 1, %s35
      %p41 = scmp.ge.s32.totalorder %s40, 4
      %s42 = scalar_select %p41, 0, %s40
      %s43 = sadd.s32 1, %s34
      %s44 = scalar_select %p41, %s43, %s34
      %p45 = scmp.ge.s32.totalorder %s44, 2
      %s46 = scalar_select %p45, 0, %s44
      %s47 = ssub.s32 %s34, %s46
      %p48 = scmp.eq.s32.totalorder %s47, 0
      %s50 = sadd.s32 %s49, 1
      %s51 = scalar_select %p48, %s49, %s50
      %p54 = pneg %p48
      %p55 = scmp.eq.s32.totalorder %s27, 7
      %p56 = por %p54, %p55
      %p57 = scmp.ne.s32.totalorder %s49, %s52
      %p58 = scmp.eq.s32.totalorder %s27, 0
      %p59 = por %p57, %p58
      %p60 = scmp.ne.s32.totalorder %s49, %s52
      %p61 = scmp.eq.s32.totalorder %s32, 7
      %p62 = por %p60, %p61
      %p63 = scmp.ne.s32.totalorder %s52, %s53
      %p64 = scmp.eq.s32.totalorder %s32, 0
      %p65 = por %p63, %p64
      %p66 = scmp.ne.s32.totalorder %s52, %s53
      %p67 = scmp.eq.s32.totalorder %s33, 7
      %p68 = por %p66, %p67
      %p70 = scmp.ne.s32.totalorder %s53, %s69
      %p71 = scmp.eq.s32.totalorder %s33, 0
      %p72 = por %p70, %p71
      %s73 = ssub.s32 %s35, %s42
      %s74 = ssub.s32 %s34, %s46
      %s75 = sor.u32 %s73, %s74
      %p76 = scmp.eq.s32.totalorder %s75, 0
      %s78 = sadd.s32 %s77, 1
      %s79 = scalar_select %p76, %s77, %s78
      %p82 = pneg %p76
      %p83 = scmp.eq.s32.totalorder %s27, 7
      %p84 = por %p82, %p83
      %p85 = scmp.ne.s32.totalorder %s77, %s80
      %p86 = scmp.eq.s32.totalorder %s27, 0
      %p87 = por %p85, %p86
      %p88 = scmp.ne.s32.totalorder %s77, %s80
      %p89 = scmp.eq.s32.totalorder %s32, 7
      %p90 = por %p88, %p89
      %p91 = scmp.ne.s32.totalorder %s80, %s81
      %p92 = scmp.eq.s32.totalorder %s32, 0
      %p93 = por %p91, %p92
      %p94 = scmp.ne.s32.totalorder %s80, %s81
      %p95 = scmp.eq.s32.totalorder %s33, 7
      %p96 = por %p94, %p95
      %p98 = scmp.ne.s32.totalorder %s81, %s97
      %p99 = scmp.eq.s32.totalorder %s33, 0
      %p100 = por %p98, %p99
      %s101 = ssub.s32 %s35, %s42
      %p102 = scmp.eq.s32.totalorder %s101, 0
      %s104 = sadd.s32 %s103, 1
      %s105 = scalar_select %p102, %s103, %s104
      %p108 = pneg %p102
      %p109 = scmp.eq.s32.totalorder %s27, 7
      %p110 = por %p108, %p109
      %p111 = scmp.ne.s32.totalorder %s103, %s106
      %p112 = scmp.eq.s32.totalorder %s27, 0
      %p113 = por %p111, %p112
      %p114 = scmp.ne.s32.totalorder %s103, %s106
      %p115 = scmp.eq.s32.totalorder %s32, 7
      %p116 = por %p114, %p115
      %p117 = scmp.ne.s32.totalorder %s106, %s107
      %p118 = scmp.eq.s32.totalorder %s32, 0
      %p119 = por %p117, %p118
      %p120 = scmp.ne.s32.totalorder %s106, %s107
      %p121 = scmp.eq.s32.totalorder %s33, 7
      %p122 = por %p120, %p121
      %p124 = scmp.ne.s32.totalorder %s107, %s123
      %p125 = scmp.eq.s32.totalorder %s33, 0
      %p126 = por %p124, %p125
      %s128 = sadd.s32 %s127, 1
      %p131 = scmp.eq.s32.totalorder %s27, 7
      %p132 = scmp.ne.s32.totalorder %s127, %s129
      %p133 = scmp.eq.s32.totalorder %s27, 0
      %p134 = por %p132, %p133
      %p135 = scmp.ne.s32.totalorder %s127, %s129
      %p136 = scmp.eq.s32.totalorder %s32, 7
      %p137 = por %p135, %p136
      %p138 = scmp.ne.s32.totalorder %s129, %s130
      %p139 = scmp.eq.s32.totalorder %s32, 0
      %p140 = por %p138, %p139
      %p141 = scmp.ne.s32.totalorder %s129, %s130
      %p142 = scmp.eq.s32.totalorder %s33, 7
      %p143 = por %p141, %p142
      %p145 = scmp.ne.s32.totalorder %s130, %s144
      %p146 = scmp.eq.s32.totalorder %s33, 0
      %p147 = por %p145, %p146
      %s149 = sadd.s32 %s148, 1
      %p152 = scmp.eq.s32.totalorder %s27, 7
      %p153 = scmp.ne.s32.totalorder %s148, %s150
      %p154 = scmp.eq.s32.totalorder %s27, 0
      %p155 = por %p153, %p154
      %p156 = scmp.ne.s32.totalorder %s148, %s150
      %p157 = scmp.eq.s32.totalorder %s32, 7
      %p158 = por %p156, %p157
      %p159 = scmp.ne.s32.totalorder %s150, %s151
      %p160 = scmp.eq.s32.totalorder %s32, 0
      %p161 = por %p159, %p160
      %p162 = scmp.ne.s32.totalorder %s150, %s151
      %p163 = scmp.eq.s32.totalorder %s33, 7
      %p164 = por %p162, %p163
      %p166 = scmp.ne.s32.totalorder %s151, %s165
      %p167 = scmp.eq.s32.totalorder %s33, 0
      %p168 = por %p166, %p167
      %s170 = sadd.s32 %s169, 1
      %p173 = scmp.eq.s32.totalorder %s27, 7
      %p174 = scmp.ne.s32.totalorder %s169, %s171
      %p175 = scmp.eq.s32.totalorder %s27, 0
      %p176 = por %p174, %p175
      %p177 = scmp.ne.s32.totalorder %s169, %s171
      %p178 = scmp.eq.s32.totalorder %s32, 7
      %p179 = por %p177, %p178
      %p180 = scmp.ne.s32.totalorder %s171, %s172
      %p181 = scmp.eq.s32.totalorder %s32, 0
      %p182 = por %p180, %p181
      %p183 = scmp.ne.s32.totalorder %s171, %s172
      %p184 = scmp.eq.s32.totalorder %s33, 7
      %p185 = por %p183, %p184
      %p187 = scmp.ne.s32.totalorder %s172, %s186
      %p188 = scmp.eq.s32.totalorder %s33, 0
      %p189 = por %p187, %p188
      %s190 = ssub.s32 %s34, %s46
      %p191 = scmp.eq.s32.totalorder %s190, 0
      %s193 = sadd.s32 %s192, 1
      %s194 = scalar_select %p191, %s192, %s193
      %p197 = pneg %p191
      %p198 = scmp.eq.s32.totalorder %s27, 7
      %p199 = por %p197, %p198
      %p200 = scmp.ne.s32.totalorder %s192, %s195
      %p201 = scmp.eq.s32.totalorder %s27, 0
      %p202 = por %p200, %p201
      %p203 = scmp.ne.s32.totalorder %s192, %s195
      %p204 = scmp.eq.s32.totalorder %s32, 7
      %p205 = por %p203, %p204
      %p206 = scmp.ne.s32.totalorder %s195, %s196
      %p207 = scmp.eq.s32.totalorder %s32, 0
      %p208 = por %p206, %p207
      %p209 = scmp.ne.s32.totalorder %s195, %s196
      %p210 = scmp.eq.s32.totalorder %s33, 7
      %p211 = por %p209, %p210
      %p213 = scmp.ne.s32.totalorder %s196, %s212
      %p214 = scmp.eq.s32.totalorder %s33, 0
      %p215 = por %p213, %p214
      %p216 = scmp.le.s32.totalorder 1, %s27
      %p217 = scmp.lt.s32.totalorder %s27, 9
      %p218 = pnand %p216, %p217
      %p219 = pneg %p218
      // Predicated region
      $region9: #{tpu_custom_call.1} parent=5 // pred_check
        _
      $region10: #{tpu_custom_call.1} parent=5 // pred_check_branch
        %221 = sbr.rel (%p218) target = $region12
      $region11: #{tpu_custom_call.1} parent=5 // pred_region
        %s222 = ssub.s32 %s27, 1
        // Predicated region
        $region13: #{tpu_custom_call.1} parent=11 // pred_check
          %p223 = pneg %p140
        $region14: #{tpu_custom_call.1} parent=11 // pred_check_branch
          %225 = sbr.rel (%p223) target = $region16
        $region15: #{tpu_custom_call.1} parent=11 // pred_region
          %s227 = ssub.s32 1024, 1024
          %228 = vsyncadd [#allocation8], %s227
          %s229 = sshll.u32 [#allocation9], 4
          %s230 = int_to_ptr.vmem [resolvable:$true] %s229
          %235 = dma.hbm_to_vmem [thread:$0]  %s4, 1024, %s230, [#allocation8], 64, 64, 4
        $region16: #{tpu_custom_call.1} parent=11 // pred_fallthru
          _
        // Predicated region
        $region17: #{tpu_custom_call.1} parent=11 // pred_check
          %p236 = pneg %p161
        $region18: #{tpu_custom_call.1} parent=11 // pred_check_branch
          %238 = sbr.rel (%p236) target = $region20
        $region19: #{tpu_custom_call.1} parent=11 // pred_region
          %s240 = ssub.s32 1024, 1024
          %241 = vsyncadd [#allocation11], %s240
          %s242 = sshll.u32 [#allocation10], 4
          %s243 = int_to_ptr.vmem [resolvable:$true] %s242
          %248 = dma.hbm_to_vmem [thread:$0]  %s5, 1024, %s243, [#allocation11], 64, 64, 4
        $region20: #{tpu_custom_call.1} parent=11 // pred_fallthru
          _
        // Predicated region
        $region21: #{tpu_custom_call.1} parent=11 // pred_check
          %p249 = pneg %p182
        $region22: #{tpu_custom_call.1} parent=11 // pred_check_branch
          %251 = sbr.rel (%p249) target = $region24
        $region23: #{tpu_custom_call.1} parent=11 // pred_region
          _
        $region24: #{tpu_custom_call.1} parent=11 // pred_fallthru
          _
      $region12: #{tpu_custom_call.1} parent=5 // pred_fallthru
        _
      %p252 = scmp.lt.s32.totalorder %s27, 8
      // Predicated region
      $region25: #{tpu_custom_call.1} parent=5 // pred_check
        %p253 = pneg %p252
      $region26: #{tpu_custom_call.1} parent=5 // pred_check_branch
        %255 = sbr.rel (%p253) target = $region28
      $region27: #{tpu_custom_call.1} parent=5 // pred_region
        // Predicated region
        $region29: #{tpu_custom_call.1} parent=27 // pred_check
          %p256 = pneg %p59
        $region30: #{tpu_custom_call.1} parent=27 // pred_check_branch
          %258 = sbr.rel (%p256) target = $region32
        $region31: #{tpu_custom_call.1} parent=27 // pred_region
          %s259 = sand.u32 %s49, 1
          %s260 = scalar_lea.sflag [#allocation5], %s259
          %s261 = sand.u32 %s49, 1
          %s262 = smul.addr %s261, 256
          %s263 = scalar_lea.vmem [#allocation4], %s262
          %s264 = smul.u32 32, %s34
          %s266 = ssub.s32 4096, 4096
          %267 = vsyncadd %s260, %s266
          %s268 = smul.addr %s264, 128
          %s269 = scalar_lea.hbm %s1, %s268
          %s270 = sshll.u32 %s263, 4
          %s271 = int_to_ptr.vmem [resolvable:$true] %s270
          %276 = dma.hbm_to_vmem [thread:$0]  %s269, 4096, %s271, %s260, 128, 128, 8
        $region32: #{tpu_custom_call.1} parent=27 // pred_fallthru
          _
        // Predicated region
        $region33: #{tpu_custom_call.1} parent=27 // pred_check
          %p277 = pneg %p87
        $region34: #{tpu_custom_call.1} parent=27 // pred_check_branch
          %279 = sbr.rel (%p277) target = $region36
        $region35: #{tpu_custom_call.1} parent=27 // pred_region
          %s280 = sand.u32 %s27, 1
          %s281 = scalar_lea.sflag [#allocation8], %s280
          %s282 = sand.u32 %s77, 1
          %s283 = smul.addr %s282, 128
          %s284 = scalar_lea.vmem [#allocation7], %s283
          %s285 = smul.u32 32, %s34
          %s287 = ssub.s32 2048, 2048
          %288 = vsyncadd %s281, %s287
          %s289 = smul.addr %s35, 64
          %s290 = sadd.s32 %s285, %s289
          %s291 = smul.addr %s290, 64
          %s292 = scalar_lea.hbm %s2, %s291
          %s293 = sshll.u32 %s284, 4
          %s294 = int_to_ptr.vmem [resolvable:$true] %s293
          %299 = dma.hbm_to_vmem [thread:$0]  %s292, 2048, %s294, %s281, 64, 64, 4
        $region36: #{tpu_custom_call.1} parent=27 // pred_fallthru
          _
        // Predicated region
        $region37: #{tpu_custom_call.1} parent=27 // pred_check
          %p300 = pneg %p113
        $region38: #{tpu_custom_call.1} parent=27 // pred_check_branch
          %302 = sbr.rel (%p300) target = $region40
        $region39: #{tpu_custom_call.1} parent=27 // pred_region
          %p303 = scmp.lt.s32.totalorder %s35, 3
          %s304 = scalar_select %p303, %s35, 3
          %s305 = smul.addr %s304, 2
          %s306 = scalar_lea.vmem %s3, %s305
        $region40: #{tpu_custom_call.1} parent=27 // pred_fallthru
          _
      $region28: #{tpu_custom_call.1} parent=5 // pred_fallthru
        _
      %p307 = scmp.le.s32.totalorder 1, %s27
      %p308 = scmp.lt.s32.totalorder %s27, 9
      %p309 = pnand %p307, %p308
      %p310 = pneg %p309
      // Predicated region
      $region41: #{tpu_custom_call.1} parent=5 // pred_check
        _
      $region42: #{tpu_custom_call.1} parent=5 // pred_check_branch
        %312 = sbr.rel (%p309) target = $region44
      $region43: #{tpu_custom_call.1} parent=5 // pred_region
        %s313 = ssub.s32 %s27, 1
        %s314 = sand.u32 %s52, 1
        %s315 = scalar_lea.sflag [#allocation5], %s314
        %s316 = sand.u32 %s52, 1
        %s317 = smul.addr %s316, 256
        %s318 = scalar_lea.vmem [#allocation4], %s317
        // Predicated region
        $region45: #{tpu_custom_call.1} parent=43 // pred_check
          %p319 = pneg %p65
        $region46: #{tpu_custom_call.1} parent=43 // pred_check_branch
          %321 = sbr.rel (%p319) target = $region48
        $region47: #{tpu_custom_call.1} parent=43 // pred_region
          %322 = dma.done %s315, 4096
        $region48: #{tpu_custom_call.1} parent=43 // pred_fallthru
          _
        %s323 = sand.u32 %s32, 1
        %s324 = scalar_lea.sflag [#allocation8], %s323
        %s325 = sand.u32 %s80, 1
        %s326 = smul.addr %s325, 128
        %s327 = scalar_lea.vmem [#allocation7], %s326
        // Predicated region
        $region49: #{tpu_custom_call.1} parent=43 // pred_check
          %p328 = pneg %p93
        $region50: #{tpu_custom_call.1} parent=43 // pred_check_branch
          %330 = sbr.rel (%p328) target = $region52
        $region51: #{tpu_custom_call.1} parent=43 // pred_region
          %331 = dma.done %s324, 2048
        $region52: #{tpu_custom_call.1} parent=43 // pred_fallthru
          _
        // Predicated region
        $region53: #{tpu_custom_call.1} parent=43 // pred_check
          %p332 = pneg %p140
        $region54: #{tpu_custom_call.1} parent=43 // pred_check_branch
          %334 = sbr.rel (%p332) target = $region56
        $region55: #{tpu_custom_call.1} parent=43 // pred_region
          %335 = dma.done [#allocation8], 1024
        $region56: #{tpu_custom_call.1} parent=43 // pred_fallthru
          _
        // Predicated region
        $region57: #{tpu_custom_call.1} parent=43 // pred_check
          %p336 = pneg %p161
        $region58: #{tpu_custom_call.1} parent=43 // pred_check_branch
          %338 = sbr.rel (%p336) target = $region60
        $region59: #{tpu_custom_call.1} parent=43 // pred_region
          %339 = dma.done [#allocation11], 1024
        $region60: #{tpu_custom_call.1} parent=43 // pred_fallthru
          _
        %s340 = sand.u32 %s52, 1
        %s341 = scalar_lea.sflag [#allocation5], %s340
        %s342 = sand.u32 %s52, 1
        %s343 = smul.addr %s342, 256
        %s344 = scalar_lea.vmem [#allocation4], %s343
        %p345 = pneg %p65
        %p346 = pneg %p62
        %s347 = sand.u32 %s32, 1
        %s348 = scalar_lea.sflag [#allocation8], %s347
        %s349 = sand.u32 %s80, 1
        %s350 = smul.addr %s349, 128
        %s351 = scalar_lea.vmem [#allocation7], %s350
        %p352 = pneg %p93
        %p353 = pneg %p90
        %p354 = scmp.lt.s32.totalorder %s37, 3
        %s355 = scalar_select %p354, %s37, 3
        %s356 = smul.addr %s355, 2
        %s357 = scalar_lea.vmem %s3, %s356
        %p358 = pneg %p119
        %p359 = pneg %p116
        %p360 = pneg %p140
        %p361 = pneg %p137
        %p362 = pneg %p161
        %p363 = pneg %p158
        %p364 = pneg %p182
        %p365 = pneg %p179
        %p366 = pneg %p208
        %p367 = pneg %p205
        %s368 = sand.u32 %s195, 1
        %s369 = scalar_lea.sflag [#allocation6], %s368
        %s370 = sand.u32 %s195, 1
        %s371 = smul.addr %s370, 256
        %s372 = scalar_lea.vmem [#allocation12], %s371
        %s373 = smul.u32 32, %s36
        %s374 = smul.u32 32, %s36
        %p375 = scmp.lt.s32.totalorder %s37, 3
        %s376 = scalar_select %p375, %s37, 3
        %s377 = smul.addr %s376, 2
        %s378 = scalar_lea.vmem %s3, %s377
        %s379 = smul.u32 32, %s36
        %p381 = scmp.eq.s32.totalorder %s37, 0
        // Predicated region
        $region61: #{tpu_custom_call.1} parent=43 // pred_check
          %p382 = pneg %p381
        $region62: #{tpu_custom_call.1} parent=43 // pred_check_branch
          %384 = sbr.rel (%p382) target = $region64
        $region63: #{tpu_custom_call.1} parent=43 // pred_region
          %v385 = vld [vmem:[%s318] sm:$0xff]
          %v386 = vld [vmem:[%s318 + $0x8] sm:$0xff]
          %v387 = vld [vmem:[%s318 + $0x10] sm:$0xff]
          %v388 = vld [vmem:[%s318 + $0x18] sm:$0xff]
          %v389 = vld [vmem:[%s318 + $0x20] sm:$0xff]
          %v390 = vld [vmem:[%s318 + $0x28] sm:$0xff]
          %v391 = vld [vmem:[%s318 + $0x30] sm:$0xff]
          %v392 = vld [vmem:[%s318 + $0x38] sm:$0xff]
          %v393 = vld [vmem:[%s318 + $0x40] sm:$0xff]
          %v394 = vld [vmem:[%s318 + $0x48] sm:$0xff]
          %v395 = vld [vmem:[%s318 + $0x50] sm:$0xff]
          %v396 = vld [vmem:[%s318 + $0x58] sm:$0xff]
          %v397 = vld [vmem:[%s318 + $0x60] sm:$0xff]
          %v398 = vld [vmem:[%s318 + $0x68] sm:$0xff]
          %v399 = vld [vmem:[%s318 + $0x70] sm:$0xff]
          %v400 = vld [vmem:[%s318 + $0x78] sm:$0xff]
          %v401 = vld [vmem:[%s318 + $0x80] sm:$0xff]
          %v402 = vld [vmem:[%s318 + $0x88] sm:$0xff]
          %v403 = vld [vmem:[%s318 + $0x90] sm:$0xff]
          %v404 = vld [vmem:[%s318 + $0x98] sm:$0xff]
          %v405 = vld [vmem:[%s318 + $0xa0] sm:$0xff]
          %v406 = vld [vmem:[%s318 + $0xa8] sm:$0xff]
          %v407 = vld [vmem:[%s318 + $0xb0] sm:$0xff]
          %v408 = vld [vmem:[%s318 + $0xb8] sm:$0xff]
          %v409 = vld [vmem:[%s318 + $0xc0] sm:$0xff]
          %v410 = vld [vmem:[%s318 + $0xc8] sm:$0xff]
          %v411 = vld [vmem:[%s318 + $0xd0] sm:$0xff]
          %v412 = vld [vmem:[%s318 + $0xd8] sm:$0xff]
          %v413 = vld [vmem:[%s318 + $0xe0] sm:$0xff]
          %v414 = vld [vmem:[%s318 + $0xe8] sm:$0xff]
          %v415 = vld [vmem:[%s318 + $0xf0] sm:$0xff]
          %v416 = vld [vmem:[%s318 + $0xf8] sm:$0xff]
          %417 = vst [vmem:[%s372] sm:$0xff] %v385
          %418 = vst [vmem:[%s372 + $0x8] sm:$0xff] %v386
          %419 = vst [vmem:[%s372 + $0x10] sm:$0xff] %v387
          %420 = vst [vmem:[%s372 + $0x18] sm:$0xff] %v388
          %421 = vst [vmem:[%s372 + $0x20] sm:$0xff] %v389
          %422 = vst [vmem:[%s372 + $0x28] sm:$0xff] %v390
          %423 = vst [vmem:[%s372 + $0x30] sm:$0xff] %v391
          %424 = vst [vmem:[%s372 + $0x38] sm:$0xff] %v392
          %425 = vst [vmem:[%s372 + $0x40] sm:$0xff] %v393
          %426 = vst [vmem:[%s372 + $0x48] sm:$0xff] %v394
          %427 = vst [vmem:[%s372 + $0x50] sm:$0xff] %v395
          %428 = vst [vmem:[%s372 + $0x58] sm:$0xff] %v396
          %429 = vst [vmem:[%s372 + $0x60] sm:$0xff] %v397
          %430 = vst [vmem:[%s372 + $0x68] sm:$0xff] %v398
          %431 = vst [vmem:[%s372 + $0x70] sm:$0xff] %v399
          %432 = vst [vmem:[%s372 + $0x78] sm:$0xff] %v400
          %433 = vst [vmem:[%s372 + $0x80] sm:$0xff] %v401
          %434 = vst [vmem:[%s372 + $0x88] sm:$0xff] %v402
          %435 = vst [vmem:[%s372 + $0x90] sm:$0xff] %v403
          %436 = vst [vmem:[%s372 + $0x98] sm:$0xff] %v404
          %437 = vst [vmem:[%s372 + $0xa0] sm:$0xff] %v405
          %438 = vst [vmem:[%s372 + $0xa8] sm:$0xff] %v406
          %439 = vst [vmem:[%s372 + $0xb0] sm:$0xff] %v407
          %440 = vst [vmem:[%s372 + $0xb8] sm:$0xff] %v408
          %441 = vst [vmem:[%s372 + $0xc0] sm:$0xff] %v409
          %442 = vst [vmem:[%s372 + $0xc8] sm:$0xff] %v410
          %443 = vst [vmem:[%s372 + $0xd0] sm:$0xff] %v411
          %444 = vst [vmem:[%s372 + $0xd8] sm:$0xff] %v412
          %445 = vst [vmem:[%s372 + $0xe0] sm:$0xff] %v413
          %446 = vst [vmem:[%s372 + $0xe8] sm:$0xff] %v414
          %447 = vst [vmem:[%s372 + $0xf0] sm:$0xff] %v415
          %448 = vst [vmem:[%s372 + $0xf8] sm:$0xff] %v416
        $region64: #{tpu_custom_call.1} parent=43 // pred_fallthru
          _
        %v449 = vld [vmem:[%s372] sm:$0xff]
        %v450 = vld [vmem:[%s372 + $0x8] sm:$0xff]
        %v451 = vld [vmem:[%s372 + $0x10] sm:$0xff]
        %v452 = vld [vmem:[%s372 + $0x18] sm:$0xff]
        %v453 = vld [vmem:[%s372 + $0x20] sm:$0xff]
        %v454 = vld [vmem:[%s372 + $0x28] sm:$0xff]
        %v455 = vld [vmem:[%s372 + $0x30] sm:$0xff]
        %v456 = vld [vmem:[%s372 + $0x38] sm:$0xff]
        %v457 = vld [vmem:[%s372 + $0x40] sm:$0xff]
        %v458 = vld [vmem:[%s372 + $0x48] sm:$0xff]
        %v459 = vld [vmem:[%s372 + $0x50] sm:$0xff]
        %v460 = vld [vmem:[%s372 + $0x58] sm:$0xff]
        %v461 = vld [vmem:[%s372 + $0x60] sm:$0xff]
        %v462 = vld [vmem:[%s372 + $0x68] sm:$0xff]
        %v463 = vld [vmem:[%s372 + $0x70] sm:$0xff]
        %v464 = vld [vmem:[%s372 + $0x78] sm:$0xff]
        %v465 = vld [vmem:[%s372 + $0x80] sm:$0xff]
        %v466 = vld [vmem:[%s372 + $0x88] sm:$0xff]
        %v467 = vld [vmem:[%s372 + $0x90] sm:$0xff]
        %v468 = vld [vmem:[%s372 + $0x98] sm:$0xff]
        %v469 = vld [vmem:[%s372 + $0xa0] sm:$0xff]
        %v470 = vld [vmem:[%s372 + $0xa8] sm:$0xff]
        %v471 = vld [vmem:[%s372 + $0xb0] sm:$0xff]
        %v472 = vld [vmem:[%s372 + $0xb8] sm:$0xff]
        %v473 = vld [vmem:[%s372 + $0xc0] sm:$0xff]
        %v474 = vld [vmem:[%s372 + $0xc8] sm:$0xff]
        %v475 = vld [vmem:[%s372 + $0xd0] sm:$0xff]
        %v476 = vld [vmem:[%s372 + $0xd8] sm:$0xff]
        %v477 = vld [vmem:[%s372 + $0xe0] sm:$0xff]
        %v478 = vld [vmem:[%s372 + $0xe8] sm:$0xff]
        %v479 = vld [vmem:[%s372 + $0xf0] sm:$0xff]
        %v480 = vld [vmem:[%s372 + $0xf8] sm:$0xff]
        %v481 = vld [vmem:[#allocation9] sm:$0xf]
        %v482 = vld [vmem:[#allocation9 + $0x4] sm:$0xf]
        %v483 = vld [vmem:[#allocation9 + $0x8] sm:$0xf]
        %v484 = vld [vmem:[#allocation9 + $0xc] sm:$0xf]
        %v485 = vld [vmem:[#allocation9 + $0x10] sm:$0xf]
        %v486 = vld [vmem:[#allocation9 + $0x14] sm:$0xf]
        %v487 = vld [vmem:[#allocation9 + $0x18] sm:$0xf]
        %v488 = vld [vmem:[#allocation9 + $0x1c] sm:$0xf]
        %v489 = vld [vmem:[#allocation9 + $0x20] sm:$0xf]
        %v490 = vld [vmem:[#allocation9 + $0x24] sm:$0xf]
        %v491 = vld [vmem:[#allocation9 + $0x28] sm:$0xf]
        %v492 = vld [vmem:[#allocation9 + $0x2c] sm:$0xf]
        %v493 = vld [vmem:[#allocation9 + $0x30] sm:$0xf]
        %v494 = vld [vmem:[#allocation9 + $0x34] sm:$0xf]
        %v495 = vld [vmem:[#allocation9 + $0x38] sm:$0xf]
        %v496 = vld [vmem:[#allocation9 + $0x3c] sm:$0xf]
        %v497 = vld [vmem:[#allocation10] sm:$0xf]
        %v498 = vld [vmem:[#allocation10 + $0x4] sm:$0xf]
        %v499 = vld [vmem:[#allocation10 + $0x8] sm:$0xf]
        %v500 = vld [vmem:[#allocation10 + $0xc] sm:$0xf]
        %v501 = vld [vmem:[#allocation10 + $0x10] sm:$0xf]
        %v502 = vld [vmem:[#allocation10 + $0x14] sm:$0xf]
        %v503 = vld [vmem:[#allocation10 + $0x18] sm:$0xf]
        %v504 = vld [vmem:[#allocation10 + $0x1c] sm:$0xf]
        %v505 = vld [vmem:[#allocation10 + $0x20] sm:$0xf]
        %v506 = vld [vmem:[#allocation10 + $0x24] sm:$0xf]
        %v507 = vld [vmem:[#allocation10 + $0x28] sm:$0xf]
        %v508 = vld [vmem:[#allocation10 + $0x2c] sm:$0xf]
        %v509 = vld [vmem:[#allocation10 + $0x30] sm:$0xf]
        %v510 = vld [vmem:[#allocation10 + $0x34] sm:$0xf]
        %v511 = vld [vmem:[#allocation10 + $0x38] sm:$0xf]
        %v512 = vld [vmem:[#allocation10 + $0x3c] sm:$0xf]
        %v513 = vld [vmem:[%s6] sm:$0x1]
        %v514 = vld [vmem:[%s378] sm:$0x3]
        %s515 = smul.u32 %s37, 128
        %s516 = sld [smem:[#allocation3 + %s515]]
        %s517 = sadd.s32 %s515, 1
        %s518 = sld [smem:[#allocation3 + %s517]]
        %s519 = sadd.s32 %s515, 2
        %s520 = sld [smem:[#allocation3 + %s519]]
        %s521 = sadd.s32 %s515, 3
        %s522 = sld [smem:[#allocation3 + %s521]]
        %s523 = sadd.s32 %s515, 4
        %s524 = sld [smem:[#allocation3 + %s523]]
        %s525 = sadd.s32 %s515, 5
        %s526 = sld [smem:[#allocation3 + %s525]]
        %v527 = vstv %s526
        %v528 = vmul.f32 %v527, %v449
        %v529 = vmul.f32 %v527, %v450
        %v530 = vmul.f32 %v527, %v451
        %v531 = vmul.f32 %v527, %v452
        %v532 = vmul.f32 %v527, %v453
        %v533 = vmul.f32 %v527, %v454
        %v534 = vmul.f32 %v527, %v455
        %v535 = vmul.f32 %v527, %v456
        %v536 = vmul.f32 %v527, %v457
        %v537 = vmul.f32 %v527, %v458
        %v538 = vmul.f32 %v527, %v459
        %v539 = vmul.f32 %v527, %v460
        %v540 = vmul.f32 %v527, %v461
        %v541 = vmul.f32 %v527, %v462
        %v542 = vmul.f32 %v527, %v463
        %v543 = vmul.f32 %v527, %v464
        %v544 = vmul.f32 %v527, %v465
        %v545 = vmul.f32 %v527, %v466
        %v546 = vmul.f32 %v527, %v467
        %v547 = vmul.f32 %v527, %v468
        %v548 = vmul.f32 %v527, %v469
        %v549 = vmul.f32 %v527, %v470
        %v550 = vmul.f32 %v527, %v471
        %v551 = vmul.f32 %v527, %v472
        %v552 = vmul.f32 %v527, %v473
        %v553 = vmul.f32 %v527, %v474
        %v554 = vmul.f32 %v527, %v475
        %v555 = vmul.f32 %v527, %v476
        %v556 = vmul.f32 %v527, %v477
        %v557 = vmul.f32 %v527, %v478
        %v558 = vmul.f32 %v527, %v479
        %v559 = vmul.f32 %v527, %v480
        %v560 = vpack.c.bf16 %v529, %v528
        %v561 = vpack.c.bf16 %v531, %v530
        %v562 = vpack.c.bf16 %v533, %v532
        %v563 = vpack.c.bf16 %v535, %v534
        %v564 = vpack.c.bf16 %v537, %v536
        %v565 = vpack.c.bf16 %v539, %v538
        %v566 = vpack.c.bf16 %v541, %v540
        %v567 = vpack.c.bf16 %v543, %v542
        %v568 = vpack.c.bf16 %v545, %v544
        %v569 = vpack.c.bf16 %v547, %v546
        %v570 = vpack.c.bf16 %v549, %v548
        %v571 = vpack.c.bf16 %v551, %v550
        %v572 = vpack.c.bf16 %v553, %v552
        %v573 = vpack.c.bf16 %v555, %v554
        %v574 = vpack.c.bf16 %v557, %v556
        %v575 = vpack.c.bf16 %v559, %v558
        %v576 = vlaneseq
        %v577 = vshrl.u32 %v576, 7
        %v578 = vsub.s32 0, %v577
        %v579 = vrot.slane %v514, %v578
        %v596 = vunpack.c.l.b16 %v481
        %v597 = vunpack.c.l.b16 %v482
        %v598 = vunpack.c.l.b16 %v483
        %v599 = vunpack.c.l.b16 %v484
        %v600 = vunpack.c.l.b16 %v485
        %v601 = vunpack.c.l.b16 %v486
        %v602 = vunpack.c.l.b16 %v487
        %v603 = vunpack.c.l.b16 %v488
        %v604 = vunpack.c.l.b16 %v489
        %v605 = vunpack.c.l.b16 %v490
        %v606 = vunpack.c.l.b16 %v491
        %v607 = vunpack.c.l.b16 %v492
        %v608 = vunpack.c.l.b16 %v493
        %v609 = vunpack.c.l.b16 %v494
        %v610 = vunpack.c.l.b16 %v495
        %v611 = vunpack.c.l.b16 %v496
        %v612 = vpack.c.b16 %v597, %v596
        %v613 = vpack.c.b16 %v599, %v598
        %v614 = vpack.c.b16 %v601, %v600
        %v615 = vpack.c.b16 %v603, %v602
        %v616 = vpack.c.b16 %v605, %v604
        %v617 = vpack.c.b16 %v607, %v606
        %v618 = vpack.c.b16 %v609, %v608
        %v619 = vpack.c.b16 %v611, %v610
        %628 = vmatprep.subr.bf16.mxu0 0
        %629 = vmatpush1.bf16.msra.mxu0 %v612
        %630 = vmatprep.subr.bf16.mxu0 0
        %631 = vmatpush1.bf16.msra.mxu0 %v613
        %632 = vmatprep.subr.bf16.mxu0 0
        %633 = vmatpush1.bf16.msra.mxu0 %v614
        %634 = vmatprep.subr.bf16.mxu0 0
        %635 = vmatpush1.bf16.msra.mxu0 %v615
        %636 = vmatprep.subr.bf16.mxu0 0
        %637 = vmatpush1.bf16.msra.mxu0 %v616
        %638 = vmatprep.subr.bf16.mxu0 0
        %639 = vmatpush1.bf16.msra.mxu0 %v617
        %640 = vmatprep.subr.bf16.mxu0 0
        %641 = vmatpush1.bf16.msra.mxu0 %v618
        %642 = vmatprep.subr.bf16.mxu0 0
        %643 = vmatpush1.bf16.msra.mxu0 %v619
        %644 = vmatprep.subr.bf16.mxu0 0
        %645 = vmatpush1.bf16.msra.mxu0 0
        %646 = vmatprep.subr.bf16.mxu0 0
        %647 = vmatpush1.bf16.msra.mxu0 0
        %648 = vmatprep.subr.bf16.mxu0 0
        %649 = vmatpush1.bf16.msra.mxu0 0
        %650 = vmatprep.subr.bf16.mxu0 0
        %651 = vmatpush1.bf16.msra.mxu0 0
        %652 = vmatprep.subr.bf16.mxu0 0
        %653 = vmatpush1.bf16.msra.mxu0 0
        %654 = vmatprep.subr.bf16.mxu0 0
        %655 = vmatpush1.bf16.msra.mxu0 0
        %656 = vmatprep.subr.bf16.mxu0 0
        %657 = vmatpush1.bf16.msra.mxu0 0
        %658 = vmatprep.subr.bf16.mxu0 0
        %659 = vmatpush1.bf16.msra.mxu0 0
        %660 = vmatprep.mubr.bf16.mxu0 0
        %661 = vmatmul.mubr.bf16.gmra.mrb[0].mxu0 %v560
        %v662 = vpop.f32.mrb[0].mxu0
        %v663 = vadd.f32 %v579, %v662
        %v664 = vpop.f32.mrb[0].mxu0
        %v665 = vpop.f32.mrb[0].mxu0
        %v666 = vadd.f32 %v579, %v665
        %v667 = vpop.f32.mrb[0].mxu0
        %668 = vmatprep.mubr.bf16.mxu0 0
        %669 = vmatmul.mubr.bf16.gmra.mrb[0].mxu0 %v561
        %v670 = vpop.f32.mrb[0].mxu0
        %v671 = vadd.f32 %v579, %v670
        %v672 = vpop.f32.mrb[0].mxu0
        %v673 = vpop.f32.mrb[0].mxu0
        %v674 = vadd.f32 %v579, %v673
        %v675 = vpop.f32.mrb[0].mxu0
        %676 = vmatprep.mubr.bf16.mxu0 0
        %677 = vmatmul.mubr.bf16.gmra.mrb[0].mxu0 %v562
        %v678 = vpop.f32.mrb[0].mxu0
        %v679 = vadd.f32 %v579, %v678
        %v680 = vpop.f32.mrb[0].mxu0
        %v681 = vpop.f32.mrb[0].mxu0
        %v682 = vadd.f32 %v579, %v681
        %v683 = vpop.f32.mrb[0].mxu0
        %684 = vmatprep.mubr.bf16.mxu0 0
        %685 = vmatmul.mubr.bf16.gmra.mrb[0].mxu0 %v563
        %v686 = vpop.f32.mrb[0].mxu0
        %v687 = vadd.f32 %v579, %v686
        %v688 = vpop.f32.mrb[0].mxu0
        %v689 = vpop.f32.mrb[0].mxu0
        %v690 = vadd.f32 %v579, %v689
        %v691 = vpop.f32.mrb[0].mxu0
        %692 = vmatprep.mubr.bf16.mxu0 0
        %693 = vmatmul.mubr.bf16.gmra.mrb[0].mxu0 %v564
        %v694 = vpop.f32.mrb[0].mxu0
        %v695 = vadd.f32 %v579, %v694
        %v696 = vpop.f32.mrb[0].mxu0
        %v697 = vpop.f32.mrb[0].mxu0
        %v698 = vadd.f32 %v579, %v697
        %v699 = vpop.f32.mrb[0].mxu0
        %700 = vmatprep.mubr.bf16.mxu0 0
        %701 = vmatmul.mubr.bf16.gmra.mrb[0].mxu0 %v565
        %v702 = vpop.f32.mrb[0].mxu0
        %v703 = vadd.f32 %v579, %v702
        %v704 = vpop.f32.mrb[0].mxu0
        %v705 = vpop.f32.mrb[0].mxu0
        %v706 = vadd.f32 %v579, %v705
        %v707 = vpop.f32.mrb[0].mxu0
        %708 = vmatprep.mubr.bf16.mxu0 0
        %709 = vmatmul.mubr.bf16.gmra.mrb[0].mxu0 %v566
        %v710 = vpop.f32.mrb[0].mxu0
        %v711 = vadd.f32 %v579, %v710
        %v712 = vpop.f32.mrb[0].mxu0
        %v713 = vpop.f32.mrb[0].mxu0
        %v714 = vadd.f32 %v579, %v713
        %v715 = vpop.f32.mrb[0].mxu0
        %716 = vmatprep.mubr.bf16.mxu0 0
        %717 = vmatmul.mubr.bf16.gmra.mrb[0].mxu0 %v567
        %v718 = vpop.f32.mrb[0].mxu0
        %v719 = vadd.f32 %v579, %v718
        %v720 = vpop.f32.mrb[0].mxu0
        %v721 = vpop.f32.mrb[0].mxu0
        %v722 = vadd.f32 %v579, %v721
        %v723 = vpop.f32.mrb[0].mxu0
        %724 = vmatprep.mubr.bf16.mxu0 0
        %725 = vmatmul.mubr.bf16.gmra.mrb[0].mxu0 %v568
        %v726 = vpop.f32.mrb[0].mxu0
        %v727 = vadd.f32 %v579, %v726
        %v728 = vpop.f32.mrb[0].mxu0
        %v729 = vpop.f32.mrb[0].mxu0
        %v730 = vadd.f32 %v579, %v729
        %v731 = vpop.f32.mrb[0].mxu0
        %732 = vmatprep.mubr.bf16.mxu0 0
        %733 = vmatmul.mubr.bf16.gmra.mrb[0].mxu0 %v569
        %v734 = vpop.f32.mrb[0].mxu0
        %v735 = vadd.f32 %v579, %v734
        %v736 = vpop.f32.mrb[0].mxu0
        %v737 = vpop.f32.mrb[0].mxu0
        %v738 = vadd.f32 %v579, %v737
        %v739 = vpop.f32.mrb[0].mxu0
        %740 = vmatprep.mubr.bf16.mxu0 0
        %741 = vmatmul.mubr.bf16.gmra.mrb[0].mxu0 %v570
        %v742 = vpop.f32.mrb[0].mxu0
        %v743 = vadd.f32 %v579, %v742
        %v744 = vpop.f32.mrb[0].mxu0
        %v745 = vpop.f32.mrb[0].mxu0
        %v746 = vadd.f32 %v579, %v745
        %v747 = vpop.f32.mrb[0].mxu0
        %748 = vmatprep.mubr.bf16.mxu0 0
        %749 = vmatmul.mubr.bf16.gmra.mrb[0].mxu0 %v571
        %v750 = vpop.f32.mrb[0].mxu0
        %v751 = vadd.f32 %v579, %v750
        %v752 = vpop.f32.mrb[0].mxu0
        %v753 = vpop.f32.mrb[0].mxu0
        %v754 = vadd.f32 %v579, %v753
        %v755 = vpop.f32.mrb[0].mxu0
        %756 = vmatprep.mubr.bf16.mxu0 0
        %757 = vmatmul.mubr.bf16.gmra.mrb[0].mxu0 %v572
        %v758 = vpop.f32.mrb[0].mxu0
        %v759 = vadd.f32 %v579, %v758
        %v760 = vpop.f32.mrb[0].mxu0
        %v761 = vpop.f32.mrb[0].mxu0
        %v762 = vadd.f32 %v579, %v761
        %v763 = vpop.f32.mrb[0].mxu0
        %764 = vmatprep.mubr.bf16.mxu0 0
        %765 = vmatmul.mubr.bf16.gmra.mrb[0].mxu0 %v573
        %v766 = vpop.f32.mrb[0].mxu0
        %v767 = vadd.f32 %v579, %v766
        %v768 = vpop.f32.mrb[0].mxu0
        %v769 = vpop.f32.mrb[0].mxu0
        %v770 = vadd.f32 %v579, %v769
        %v771 = vpop.f32.mrb[0].mxu0
        %772 = vmatprep.mubr.bf16.mxu0 0
        %773 = vmatmul.mubr.bf16.gmra.mrb[0].mxu0 %v574
        %v774 = vpop.f32.mrb[0].mxu0
        %v775 = vadd.f32 %v579, %v774
        %v776 = vpop.f32.mrb[0].mxu0
        %v777 = vpop.f32.mrb[0].mxu0
        %v778 = vadd.f32 %v579, %v777
        %v779 = vpop.f32.mrb[0].mxu0
        %780 = vmatprep.mubr.bf16.mxu0 0
        %781 = vmatmul.mubr.bf16.gmra.mrb[0].mxu0 %v575
        %v782 = vpop.f32.mrb[0].mxu0
        %v783 = vadd.f32 %v579, %v782
        %v784 = vpop.f32.mrb[0].mxu0
        %v785 = vpop.f32.mrb[0].mxu0
        %v786 = vadd.f32 %v579, %v785
        %v787 = vpop.f32.mrb[0].mxu0
        %788 = vdwg.mxu0
        %v789 = vtanh.pop %v663
        %v790 = vtanh.pop %v666
        %v791 = vtanh.pop %v671
        %v792 = vtanh.pop %v674
        %v793 = vtanh.pop %v679
        %v794 = vtanh.pop %v682
        %v795 = vtanh.pop %v687
        %v796 = vtanh.pop %v690
        %v797 = vtanh.pop %v695
        %v798 = vtanh.pop %v698
        %v799 = vtanh.pop %v703
        %v800 = vtanh.pop %v706
        %v801 = vtanh.pop %v711
        %v802 = vtanh.pop %v714
        %v803 = vtanh.pop %v719
        %v804 = vtanh.pop %v722
        %v805 = vtanh.pop %v727
        %v806 = vtanh.pop %v730
        %v807 = vtanh.pop %v735
        %v808 = vtanh.pop %v738
        %v809 = vtanh.pop %v743
        %v810 = vtanh.pop %v746
        %v811 = vtanh.pop %v751
        %v812 = vtanh.pop %v754
        %v813 = vtanh.pop %v759
        %v814 = vtanh.pop %v762
        %v815 = vtanh.pop %v767
        %v816 = vtanh.pop %v770
        %v817 = vtanh.pop %v775
        %v818 = vtanh.pop %v778
        %v819 = vtanh.pop %v783
        %v820 = vtanh.pop %v786
        %v821 = vpack.c.bf16 %v790, %v789
        %v822 = vpack.c.bf16 %v792, %v791
        %v823 = vpack.c.bf16 %v794, %v793
        %v824 = vpack.c.bf16 %v796, %v795
        %v825 = vpack.c.bf16 %v798, %v797
        %v826 = vpack.c.bf16 %v800, %v799
        %v827 = vpack.c.bf16 %v802, %v801
        %v828 = vpack.c.bf16 %v804, %v803
        %v829 = vpack.c.bf16 %v806, %v805
        %v830 = vpack.c.bf16 %v808, %v807
        %v831 = vpack.c.bf16 %v810, %v809
        %v832 = vpack.c.bf16 %v812, %v811
        %v833 = vpack.c.bf16 %v814, %v813
        %v834 = vpack.c.bf16 %v816, %v815
        %v835 = vpack.c.bf16 %v818, %v817
        %v836 = vpack.c.bf16 %v820, %v819
        %v838 = vlaneseq
        %v839 = vshrl.u32 %v838, 7
        %v840 = vsub.s32 0, %v839
        %v841 = vrot.slane %v513, %v840
        %v859 = vunpack.c.l.b16 %v497
        %v860 = vunpack.c.l.b16 %v498
        %v861 = vunpack.c.l.b16 %v499
        %v862 = vunpack.c.l.b16 %v500
        %v863 = vunpack.c.l.b16 %v501
        %v864 = vunpack.c.l.b16 %v502
        %v865 = vunpack.c.l.b16 %v503
        %v866 = vunpack.c.l.b16 %v504
        %v867 = vunpack.c.l.b16 %v505
        %v868 = vunpack.c.l.b16 %v506
        %v869 = vunpack.c.l.b16 %v507
        %v870 = vunpack.c.l.b16 %v508
        %v871 = vunpack.c.l.b16 %v509
        %v872 = vunpack.c.l.b16 %v510
        %v873 = vunpack.c.l.b16 %v511
        %v874 = vunpack.c.l.b16 %v512
        %v875 = vpack.c.b16 %v860, %v859
        %v876 = vpack.c.b16 %v862, %v861
        %v877 = vpack.c.b16 %v864, %v863
        %v878 = vpack.c.b16 %v866, %v865
        %v879 = vpack.c.b16 %v868, %v867
        %v880 = vpack.c.b16 %v870, %v869
        %v881 = vpack.c.b16 %v872, %v871
        %v882 = vpack.c.b16 %v874, %v873
        %891 = vmatprep.subr.bf16.mxu0 0
        %892 = vmatpush1.bf16.msra.mxu0 %v875
        %893 = vmatprep.subr.bf16.mxu0 0
        %894 = vmatpush1.bf16.msra.mxu0 %v876
        %895 = vmatprep.subr.bf16.mxu0 0
        %896 = vmatpush1.bf16.msra.mxu0 %v877
        %897 = vmatprep.subr.bf16.mxu0 0
        %898 = vmatpush1.bf16.msra.mxu0 %v878
        %899 = vmatprep.subr.bf16.mxu0 0
        %900 = vmatpush1.bf16.msra.mxu0 %v879
        %901 = vmatprep.subr.bf16.mxu0 0
        %902 = vmatpush1.bf16.msra.mxu0 %v880
        %903 = vmatprep.subr.bf16.mxu0 0
        %904 = vmatpush1.bf16.msra.mxu0 %v881
        %905 = vmatprep.subr.bf16.mxu0 0
        %906 = vmatpush1.bf16.msra.mxu0 %v882
        %907 = vmatprep.subr.bf16.mxu0 0
        %908 = vmatpush1.bf16.msra.mxu0 0
        %909 = vmatprep.subr.bf16.mxu0 0
        %910 = vmatpush1.bf16.msra.mxu0 0
        %911 = vmatprep.subr.bf16.mxu0 0
        %912 = vmatpush1.bf16.msra.mxu0 0
        %913 = vmatprep.subr.bf16.mxu0 0
        %914 = vmatpush1.bf16.msra.mxu0 0
        %915 = vmatprep.subr.bf16.mxu0 0
        %916 = vmatpush1.bf16.msra.mxu0 0
        %917 = vmatprep.subr.bf16.mxu0 0
        %918 = vmatpush1.bf16.msra.mxu0 0
        %919 = vmatprep.subr.bf16.mxu0 0
        %920 = vmatpush1.bf16.msra.mxu0 0
        %921 = vmatprep.subr.bf16.mxu0 0
        %922 = vmatpush1.bf16.msra.mxu0 0
        %923 = vmatprep.mubr.bf16.mxu0 0
        %924 = vmatmul.mubr.bf16.gmra.mrb[0].mxu0 %v821
        %v925 = vpop.f32.mrb[0].mxu0
        %v926 = vadd.f32 %v841, %v925
        %v927 = vpop.f32.mrb[0].mxu0
        %v928 = vpop.f32.mrb[0].mxu0
        %v929 = vadd.f32 %v841, %v928
        %v930 = vpop.f32.mrb[0].mxu0
        %931 = vmatprep.mubr.bf16.mxu0 0
        %932 = vmatmul.mubr.bf16.gmra.mrb[0].mxu0 %v822
        %v933 = vpop.f32.mrb[0].mxu0
        %v934 = vadd.f32 %v841, %v933
        %v935 = vpop.f32.mrb[0].mxu0
        %v936 = vpop.f32.mrb[0].mxu0
        %v937 = vadd.f32 %v841, %v936
        %v938 = vpop.f32.mrb[0].mxu0
        %939 = vmatprep.mubr.bf16.mxu0 0
        %940 = vmatmul.mubr.bf16.gmra.mrb[0].mxu0 %v823
        %v941 = vpop.f32.mrb[0].mxu0
        %v942 = vadd.f32 %v841, %v941
        %v943 = vpop.f32.mrb[0].mxu0
        %v944 = vpop.f32.mrb[0].mxu0
        %v945 = vadd.f32 %v841, %v944
        %v946 = vpop.f32.mrb[0].mxu0
        %947 = vmatprep.mubr.bf16.mxu0 0
        %948 = vmatmul.mubr.bf16.gmra.mrb[0].mxu0 %v824
        %v949 = vpop.f32.mrb[0].mxu0
        %v950 = vadd.f32 %v841, %v949
        %v951 = vpop.f32.mrb[0].mxu0
        %v952 = vpop.f32.mrb[0].mxu0
        %v953 = vadd.f32 %v841, %v952
        %v954 = vpop.f32.mrb[0].mxu0
        %955 = vmatprep.mubr.bf16.mxu0 0
        %956 = vmatmul.mubr.bf16.gmra.mrb[0].mxu0 %v825
        %v957 = vpop.f32.mrb[0].mxu0
        %v958 = vadd.f32 %v841, %v957
        %v959 = vpop.f32.mrb[0].mxu0
        %v960 = vpop.f32.mrb[0].mxu0
        %v961 = vadd.f32 %v841, %v960
        %v962 = vpop.f32.mrb[0].mxu0
        %963 = vmatprep.mubr.bf16.mxu0 0
        %964 = vmatmul.mubr.bf16.gmra.mrb[0].mxu0 %v826
        %v965 = vpop.f32.mrb[0].mxu0
        %v966 = vadd.f32 %v841, %v965
        %v967 = vpop.f32.mrb[0].mxu0
        %v968 = vpop.f32.mrb[0].mxu0
        %v969 = vadd.f32 %v841, %v968
        %v970 = vpop.f32.mrb[0].mxu0
        %971 = vmatprep.mubr.bf16.mxu0 0
        %972 = vmatmul.mubr.bf16.gmra.mrb[0].mxu0 %v827
        %v973 = vpop.f32.mrb[0].mxu0
        %v974 = vadd.f32 %v841, %v973
        %v975 = vpop.f32.mrb[0].mxu0
        %v976 = vpop.f32.mrb[0].mxu0
        %v977 = vadd.f32 %v841, %v976
        %v978 = vpop.f32.mrb[0].mxu0
        %979 = vmatprep.mubr.bf16.mxu0 0
        %980 = vmatmul.mubr.bf16.gmra.mrb[0].mxu0 %v828
        %v981 = vpop.f32.mrb[0].mxu0
        %v982 = vadd.f32 %v841, %v981
        %v983 = vpop.f32.mrb[0].mxu0
        %v984 = vpop.f32.mrb[0].mxu0
        %v985 = vadd.f32 %v841, %v984
        %v986 = vpop.f32.mrb[0].mxu0
        %987 = vmatprep.mubr.bf16.mxu0 0
        %988 = vmatmul.mubr.bf16.gmra.mrb[0].mxu0 %v829
        %v989 = vpop.f32.mrb[0].mxu0
        %v990 = vadd.f32 %v841, %v989
        %v991 = vpop.f32.mrb[0].mxu0
        %v992 = vpop.f32.mrb[0].mxu0
        %v993 = vadd.f32 %v841, %v992
        %v994 = vpop.f32.mrb[0].mxu0
        %995 = vmatprep.mubr.bf16.mxu0 0
        %996 = vmatmul.mubr.bf16.gmra.mrb[0].mxu0 %v830
        %v997 = vpop.f32.mrb[0].mxu0
        %v998 = vadd.f32 %v841, %v997
        %v999 = vpop.f32.mrb[0].mxu0
        %v1000 = vpop.f32.mrb[0].mxu0
        %v1001 = vadd.f32 %v841, %v1000
        %v1002 = vpop.f32.mrb[0].mxu0
        %1003 = vmatprep.mubr.bf16.mxu0 0
        %1004 = vmatmul.mubr.bf16.gmra.mrb[0].mxu0 %v831
        %v1005 = vpop.f32.mrb[0].mxu0
        %v1006 = vadd.f32 %v841, %v1005
        %v1007 = vpop.f32.mrb[0].mxu0
        %v1008 = vpop.f32.mrb[0].mxu0
        %v1009 = vadd.f32 %v841, %v1008
        %v1010 = vpop.f32.mrb[0].mxu0
        %1011 = vmatprep.mubr.bf16.mxu0 0
        %1012 = vmatmul.mubr.bf16.gmra.mrb[0].mxu0 %v832
        %v1013 = vpop.f32.mrb[0].mxu0
        %v1014 = vadd.f32 %v841, %v1013
        %v1015 = vpop.f32.mrb[0].mxu0
        %v1016 = vpop.f32.mrb[0].mxu0
        %v1017 = vadd.f32 %v841, %v1016
        %v1018 = vpop.f32.mrb[0].mxu0
        %1019 = vmatprep.mubr.bf16.mxu0 0
        %1020 = vmatmul.mubr.bf16.gmra.mrb[0].mxu0 %v833
        %v1021 = vpop.f32.mrb[0].mxu0
        %v1022 = vadd.f32 %v841, %v1021
        %v1023 = vpop.f32.mrb[0].mxu0
        %v1024 = vpop.f32.mrb[0].mxu0
        %v1025 = vadd.f32 %v841, %v1024
        %v1026 = vpop.f32.mrb[0].mxu0
        %1027 = vmatprep.mubr.bf16.mxu0 0
        %1028 = vmatmul.mubr.bf16.gmra.mrb[0].mxu0 %v834
        %v1029 = vpop.f32.mrb[0].mxu0
        %v1030 = vadd.f32 %v841, %v1029
        %v1031 = vpop.f32.mrb[0].mxu0
        %v1032 = vpop.f32.mrb[0].mxu0
        %v1033 = vadd.f32 %v841, %v1032
        %v1034 = vpop.f32.mrb[0].mxu0
        %1035 = vmatprep.mubr.bf16.mxu0 0
        %1036 = vmatmul.mubr.bf16.gmra.mrb[0].mxu0 %v835
        %v1037 = vpop.f32.mrb[0].mxu0
        %v1038 = vadd.f32 %v841, %v1037
        %v1039 = vpop.f32.mrb[0].mxu0
        %v1040 = vpop.f32.mrb[0].mxu0
        %v1041 = vadd.f32 %v841, %v1040
        %v1042 = vpop.f32.mrb[0].mxu0
        %1043 = vmatprep.mubr.bf16.mxu0 0
        %1044 = vmatmul.mubr.bf16.gmra.mrb[0].mxu0 %v836
        %v1045 = vpop.f32.mrb[0].mxu0
        %v1046 = vadd.f32 %v841, %v1045
        %v1047 = vpop.f32.mrb[0].mxu0
        %v1048 = vpop.f32.mrb[0].mxu0
        %v1049 = vadd.f32 %v841, %v1048
        %v1050 = vpop.f32.mrb[0].mxu0
        %1051 = vdwg.mxu0
        %v1052 = vstv %s522
        %v1053 = vmul.f32 %v1052, %v449
        %v1054 = vmul.f32 %v1052, %v450
        %v1055 = vmul.f32 %v1052, %v451
        %v1056 = vmul.f32 %v1052, %v452
        %v1057 = vmul.f32 %v1052, %v453
        %v1058 = vmul.f32 %v1052, %v454
        %v1059 = vmul.f32 %v1052, %v455
        %v1060 = vmul.f32 %v1052, %v456
        %v1061 = vmul.f32 %v1052, %v457
        %v1062 = vmul.f32 %v1052, %v458
        %v1063 = vmul.f32 %v1052, %v459
        %v1064 = vmul.f32 %v1052, %v460
        %v1065 = vmul.f32 %v1052, %v461
        %v1066 = vmul.f32 %v1052, %v462
        %v1067 = vmul.f32 %v1052, %v463
        %v1068 = vmul.f32 %v1052, %v464
        %v1069 = vmul.f32 %v1052, %v465
        %v1070 = vmul.f32 %v1052, %v466
        %v1071 = vmul.f32 %v1052, %v467
        %v1072 = vmul.f32 %v1052, %v468
        %v1073 = vmul.f32 %v1052, %v469
        %v1074 = vmul.f32 %v1052, %v470
        %v1075 = vmul.f32 %v1052, %v471
        %v1076 = vmul.f32 %v1052, %v472
        %v1077 = vmul.f32 %v1052, %v473
        %v1078 = vmul.f32 %v1052, %v474
        %v1079 = vmul.f32 %v1052, %v475
        %v1080 = vmul.f32 %v1052, %v476
        %v1081 = vmul.f32 %v1052, %v477
        %v1082 = vmul.f32 %v1052, %v478
        %v1083 = vmul.f32 %v1052, %v479
        %v1084 = vmul.f32 %v1052, %v480
        %v1085 = vstv %s524
        %v1086 = vmul.f32 %v1085, %v926
        %v1087 = vmul.f32 %v1085, %v929
        %v1088 = vmul.f32 %v1085, %v934
        %v1089 = vmul.f32 %v1085, %v937
        %v1090 = vmul.f32 %v1085, %v942
        %v1091 = vmul.f32 %v1085, %v945
        %v1092 = vmul.f32 %v1085, %v950
        %v1093 = vmul.f32 %v1085, %v953
        %v1094 = vmul.f32 %v1085, %v958
        %v1095 = vmul.f32 %v1085, %v961
        %v1096 = vmul.f32 %v1085, %v966
        %v1097 = vmul.f32 %v1085, %v969
        %v1098 = vmul.f32 %v1085, %v974
        %v1099 = vmul.f32 %v1085, %v977
        %v1100 = vmul.f32 %v1085, %v982
        %v1101 = vmul.f32 %v1085, %v985
        %v1102 = vmul.f32 %v1085, %v990
        %v1103 = vmul.f32 %v1085, %v993
        %v1104 = vmul.f32 %v1085, %v998
        %v1105 = vmul.f32 %v1085, %v1001
        %v1106 = vmul.f32 %v1085, %v1006
        %v1107 = vmul.f32 %v1085, %v1009
        %v1108 = vmul.f32 %v1085, %v1014
        %v1109 = vmul.f32 %v1085, %v1017
        %v1110 = vmul.f32 %v1085, %v1022
        %v1111 = vmul.f32 %v1085, %v1025
        %v1112 = vmul.f32 %v1085, %v1030
        %v1113 = vmul.f32 %v1085, %v1033
        %v1114 = vmul.f32 %v1085, %v1038
        %v1115 = vmul.f32 %v1085, %v1041
        %v1116 = vmul.f32 %v1085, %v1046
        %v1117 = vmul.f32 %v1085, %v1049
        %v1118 = vadd.f32 %v1053, %v1086
        %v1119 = vadd.f32 %v1054, %v1087
        %v1120 = vadd.f32 %v1055, %v1088
        %v1121 = vadd.f32 %v1056, %v1089
        %v1122 = vadd.f32 %v1057, %v1090
        %v1123 = vadd.f32 %v1058, %v1091
        %v1124 = vadd.f32 %v1059, %v1092
        %v1125 = vadd.f32 %v1060, %v1093
        %v1126 = vadd.f32 %v1061, %v1094
        %v1127 = vadd.f32 %v1062, %v1095
        %v1128 = vadd.f32 %v1063, %v1096
        %v1129 = vadd.f32 %v1064, %v1097
        %v1130 = vadd.f32 %v1065, %v1098
        %v1131 = vadd.f32 %v1066, %v1099
        %v1132 = vadd.f32 %v1067, %v1100
        %v1133 = vadd.f32 %v1068, %v1101
        %v1134 = vadd.f32 %v1069, %v1102
        %v1135 = vadd.f32 %v1070, %v1103
        %v1136 = vadd.f32 %v1071, %v1104
        %v1137 = vadd.f32 %v1072, %v1105
        %v1138 = vadd.f32 %v1073, %v1106
        %v1139 = vadd.f32 %v1074, %v1107
        %v1140 = vadd.f32 %v1075, %v1108
        %v1141 = vadd.f32 %v1076, %v1109
        %v1142 = vadd.f32 %v1077, %v1110
        %v1143 = vadd.f32 %v1078, %v1111
        %v1144 = vadd.f32 %v1079, %v1112
        %v1145 = vadd.f32 %v1080, %v1113
        %v1146 = vadd.f32 %v1081, %v1114
        %v1147 = vadd.f32 %v1082, %v1115
        %v1148 = vadd.f32 %v1083, %v1116
        %v1149 = vadd.f32 %v1084, %v1117
        %v1150 = vsub.f32 %v449, %v1118
        %v1151 = vsub.f32 %v450, %v1119
        %v1152 = vsub.f32 %v451, %v1120
        %v1153 = vsub.f32 %v452, %v1121
        %v1154 = vsub.f32 %v453, %v1122
        %v1155 = vsub.f32 %v454, %v1123
        %v1156 = vsub.f32 %v455, %v1124
        %v1157 = vsub.f32 %v456, %v1125
        %v1158 = vsub.f32 %v457, %v1126
        %v1159 = vsub.f32 %v458, %v1127
        %v1160 = vsub.f32 %v459, %v1128
        %v1161 = vsub.f32 %v460, %v1129
        %v1162 = vsub.f32 %v461, %v1130
        %v1163 = vsub.f32 %v462, %v1131
        %v1164 = vsub.f32 %v463, %v1132
        %v1165 = vsub.f32 %v464, %v1133
        %v1166 = vsub.f32 %v465, %v1134
        %v1167 = vsub.f32 %v466, %v1135
        %v1168 = vsub.f32 %v467, %v1136
        %v1169 = vsub.f32 %v468, %v1137
        %v1170 = vsub.f32 %v469, %v1138
        %v1171 = vsub.f32 %v470, %v1139
        %v1172 = vsub.f32 %v471, %v1140
        %v1173 = vsub.f32 %v472, %v1141
        %v1174 = vsub.f32 %v473, %v1142
        %v1175 = vsub.f32 %v474, %v1143
        %v1176 = vsub.f32 %v475, %v1144
        %v1177 = vsub.f32 %v476, %v1145
        %v1178 = vsub.f32 %v477, %v1146
        %v1179 = vsub.f32 %v478, %v1147
        %v1180 = vsub.f32 %v479, %v1148
        %v1181 = vsub.f32 %v480, %v1149
        %v1182 = vstv %s518
        %v1183 = vmul.f32 %v1150, %v1182
        %v1184 = vmul.f32 %v1151, %v1182
        %v1185 = vmul.f32 %v1152, %v1182
        %v1186 = vmul.f32 %v1153, %v1182
        %v1187 = vmul.f32 %v1154, %v1182
        %v1188 = vmul.f32 %v1155, %v1182
        %v1189 = vmul.f32 %v1156, %v1182
        %v1190 = vmul.f32 %v1157, %v1182
        %v1191 = vmul.f32 %v1158, %v1182
        %v1192 = vmul.f32 %v1159, %v1182
        %v1193 = vmul.f32 %v1160, %v1182
        %v1194 = vmul.f32 %v1161, %v1182
        %v1195 = vmul.f32 %v1162, %v1182
        %v1196 = vmul.f32 %v1163, %v1182
        %v1197 = vmul.f32 %v1164, %v1182
        %v1198 = vmul.f32 %v1165, %v1182
        %v1199 = vmul.f32 %v1166, %v1182
        %v1200 = vmul.f32 %v1167, %v1182
        %v1201 = vmul.f32 %v1168, %v1182
        %v1202 = vmul.f32 %v1169, %v1182
        %v1203 = vmul.f32 %v1170, %v1182
        %v1204 = vmul.f32 %v1171, %v1182
        %v1205 = vmul.f32 %v1172, %v1182
        %v1206 = vmul.f32 %v1173, %v1182
        %v1207 = vmul.f32 %v1174, %v1182
        %v1208 = vmul.f32 %v1175, %v1182
        %v1209 = vmul.f32 %v1176, %v1182
        %v1210 = vmul.f32 %v1177, %v1182
        %v1211 = vmul.f32 %v1178, %v1182
        %v1212 = vmul.f32 %v1179, %v1182
        %v1213 = vmul.f32 %v1180, %v1182
        %v1214 = vmul.f32 %v1181, %v1182
        %v1215 = vadd.f32 %v449, %v1183
        %v1216 = vadd.f32 %v450, %v1184
        %v1217 = vadd.f32 %v451, %v1185
        %v1218 = vadd.f32 %v452, %v1186
        %v1219 = vadd.f32 %v453, %v1187
        %v1220 = vadd.f32 %v454, %v1188
        %v1221 = vadd.f32 %v455, %v1189
        %v1222 = vadd.f32 %v456, %v1190
        %v1223 = vadd.f32 %v457, %v1191
        %v1224 = vadd.f32 %v458, %v1192
        %v1225 = vadd.f32 %v459, %v1193
        %v1226 = vadd.f32 %v460, %v1194
        %v1227 = vadd.f32 %v461, %v1195
        %v1228 = vadd.f32 %v462, %v1196
        %v1229 = vadd.f32 %v463, %v1197
        %v1230 = vadd.f32 %v464, %v1198
        %v1231 = vadd.f32 %v465, %v1199
        %v1232 = vadd.f32 %v466, %v1200
        %v1233 = vadd.f32 %v467, %v1201
        %v1234 = vadd.f32 %v468, %v1202
        %v1235 = vadd.f32 %v469, %v1203
        %v1236 = vadd.f32 %v470, %v1204
        %v1237 = vadd.f32 %v471, %v1205
        %v1238 = vadd.f32 %v472, %v1206
        %v1239 = vadd.f32 %v473, %v1207
        %v1240 = vadd.f32 %v474, %v1208
        %v1241 = vadd.f32 %v475, %v1209
        %v1242 = vadd.f32 %v476, %v1210
        %v1243 = vadd.f32 %v477, %v1211
        %v1244 = vadd.f32 %v478, %v1212
        %v1245 = vadd.f32 %v479, %v1213
        %v1246 = vadd.f32 %v480, %v1214
        %s1247 = sadd.s32 %s515, 6
        %s1248 = sld [smem:[#allocation3 + %s1247]]
        %s1249 = sadd.s32 %s515, 7
        %s1250 = sld [smem:[#allocation3 + %s1249]]
        %s1251 = sadd.s32 %s515, 8
        %s1252 = sld [smem:[#allocation3 + %s1251]]
        %v1253 = vstv %s1252
        %v1254 = vmul.f32 %v1253, %v1215
        %v1255 = vmul.f32 %v1253, %v1216
        %v1256 = vmul.f32 %v1253, %v1217
        %v1257 = vmul.f32 %v1253, %v1218
        %v1258 = vmul.f32 %v1253, %v1219
        %v1259 = vmul.f32 %v1253, %v1220
        %v1260 = vmul.f32 %v1253, %v1221
        %v1261 = vmul.f32 %v1253, %v1222
        %v1262 = vmul.f32 %v1253, %v1223
        %v1263 = vmul.f32 %v1253, %v1224
        %v1264 = vmul.f32 %v1253, %v1225
        %v1265 = vmul.f32 %v1253, %v1226
        %v1266 = vmul.f32 %v1253, %v1227
        %v1267 = vmul.f32 %v1253, %v1228
        %v1268 = vmul.f32 %v1253, %v1229
        %v1269 = vmul.f32 %v1253, %v1230
        %v1270 = vmul.f32 %v1253, %v1231
        %v1271 = vmul.f32 %v1253, %v1232
        %v1272 = vmul.f32 %v1253, %v1233
        %v1273 = vmul.f32 %v1253, %v1234
        %v1274 = vmul.f32 %v1253, %v1235
        %v1275 = vmul.f32 %v1253, %v1236
        %v1276 = vmul.f32 %v1253, %v1237
        %v1277 = vmul.f32 %v1253, %v1238
        %v1278 = vmul.f32 %v1253, %v1239
        %v1279 = vmul.f32 %v1253, %v1240
        %v1280 = vmul.f32 %v1253, %v1241
        %v1281 = vmul.f32 %v1253, %v1242
        %v1282 = vmul.f32 %v1253, %v1243
        %v1283 = vmul.f32 %v1253, %v1244
        %v1284 = vmul.f32 %v1253, %v1245
        %v1285 = vmul.f32 %v1253, %v1246
        %v1286 = vpack.c.bf16 %v1255, %v1254
        %v1287 = vpack.c.bf16 %v1257, %v1256
        %v1288 = vpack.c.bf16 %v1259, %v1258
        %v1289 = vpack.c.bf16 %v1261, %v1260
        %v1290 = vpack.c.bf16 %v1263, %v1262
        %v1291 = vpack.c.bf16 %v1265, %v1264
        %v1292 = vpack.c.bf16 %v1267, %v1266
        %v1293 = vpack.c.bf16 %v1269, %v1268
        %v1294 = vpack.c.bf16 %v1271, %v1270
        %v1295 = vpack.c.bf16 %v1273, %v1272
        %v1296 = vpack.c.bf16 %v1275, %v1274
        %v1297 = vpack.c.bf16 %v1277, %v1276
        %v1298 = vpack.c.bf16 %v1279, %v1278
        %v1299 = vpack.c.bf16 %v1281, %v1280
        %v1300 = vpack.c.bf16 %v1283, %v1282
        %v1301 = vpack.c.bf16 %v1285, %v1284
        %v1302 = vlaneseq
        %v1303 = vshrl.u32 %v1302, 7
        %v1304 = vsub.s32 1, %v1303
        %v1305 = vrot.slane %v514, %v1304
        %1306 = vmatprep.subr.bf16.mxu0 0
        %1307 = vmatpush1.bf16.msra.mxu0 %v612
        %1308 = vmatprep.subr.bf16.mxu0 0
        %1309 = vmatpush1.bf16.msra.mxu0 %v613
        %1310 = vmatprep.subr.bf16.mxu0 0
        %1311 = vmatpush1.bf16.msra.mxu0 %v614
        %1312 = vmatprep.subr.bf16.mxu0 0
        %1313 = vmatpush1.bf16.msra.mxu0 %v615
        %1314 = vmatprep.subr.bf16.mxu0 0
        %1315 = vmatpush1.bf16.msra.mxu0 %v616
        %1316 = vmatprep.subr.bf16.mxu0 0
        %1317 = vmatpush1.bf16.msra.mxu0 %v617
        %1318 = vmatprep.subr.bf16.mxu0 0
        %1319 = vmatpush1.bf16.msra.mxu0 %v618
        %1320 = vmatprep.subr.bf16.mxu0 0
        %1321 = vmatpush1.bf16.msra.mxu0 %v619
        %1322 = vmatprep.subr.bf16.mxu0 0
        %1323 = vmatpush1.bf16.msra.mxu0 0
        %1324 = vmatprep.subr.bf16.mxu0 0
        %1325 = vmatpush1.bf16.msra.mxu0 0
        %1326 = vmatprep.subr.bf16.mxu0 0
        %1327 = vmatpush1.bf16.msra.mxu0 0
        %1328 = vmatprep.subr.bf16.mxu0 0
        %1329 = vmatpush1.bf16.msra.mxu0 0
        %1330 = vmatprep.subr.bf16.mxu0 0
        %1331 = vmatpush1.bf16.msra.mxu0 0
        %1332 = vmatprep.subr.bf16.mxu0 0
        %1333 = vmatpush1.bf16.msra.mxu0 0
        %1334 = vmatprep.subr.bf16.mxu0 0
        %1335 = vmatpush1.bf16.msra.mxu0 0
        %1336 = vmatprep.subr.bf16.mxu0 0
        %1337 = vmatpush1.bf16.msra.mxu0 0
        %1338 = vmatprep.mubr.bf16.mxu0 0
        %1339 = vmatmul.mubr.bf16.gmra.mrb[0].mxu0 %v1286
        %v1340 = vpop.f32.mrb[0].mxu0
        %v1341 = vadd.f32 %v1305, %v1340
        %v1342 = vpop.f32.mrb[0].mxu0
        %v1343 = vpop.f32.mrb[0].mxu0
        %v1344 = vadd.f32 %v1305, %v1343
        %v1345 = vpop.f32.mrb[0].mxu0
        %1346 = vmatprep.mubr.bf16.mxu0 0
        %1347 = vmatmul.mubr.bf16.gmra.mrb[0].mxu0 %v1287
        %v1348 = vpop.f32.mrb[0].mxu0
        %v1349 = vadd.f32 %v1305, %v1348
        %v1350 = vpop.f32.mrb[0].mxu0
        %v1351 = vpop.f32.mrb[0].mxu0
        %v1352 = vadd.f32 %v1305, %v1351
        %v1353 = vpop.f32.mrb[0].mxu0
        %1354 = vmatprep.mubr.bf16.mxu0 0
        %1355 = vmatmul.mubr.bf16.gmra.mrb[0].mxu0 %v1288
        %v1356 = vpop.f32.mrb[0].mxu0
        %v1357 = vadd.f32 %v1305, %v1356
        %v1358 = vpop.f32.mrb[0].mxu0
        %v1359 = vpop.f32.mrb[0].mxu0
        %v1360 = vadd.f32 %v1305, %v1359
        %v1361 = vpop.f32.mrb[0].mxu0
        %1362 = vmatprep.mubr.bf16.mxu0 0
        %1363 = vmatmul.mubr.bf16.gmra.mrb[0].mxu0 %v1289
        %v1364 = vpop.f32.mrb[0].mxu0
        %v1365 = vadd.f32 %v1305, %v1364
        %v1366 = vpop.f32.mrb[0].mxu0
        %v1367 = vpop.f32.mrb[0].mxu0
        %v1368 = vadd.f32 %v1305, %v1367
        %v1369 = vpop.f32.mrb[0].mxu0
        %1370 = vmatprep.mubr.bf16.mxu0 0
        %1371 = vmatmul.mubr.bf16.gmra.mrb[0].mxu0 %v1290
        %v1372 = vpop.f32.mrb[0].mxu0
        %v1373 = vadd.f32 %v1305, %v1372
        %v1374 = vpop.f32.mrb[0].mxu0
        %v1375 = vpop.f32.mrb[0].mxu0
        %v1376 = vadd.f32 %v1305, %v1375
        %v1377 = vpop.f32.mrb[0].mxu0
        %1378 = vmatprep.mubr.bf16.mxu0 0
        %1379 = vmatmul.mubr.bf16.gmra.mrb[0].mxu0 %v1291
        %v1380 = vpop.f32.mrb[0].mxu0
        %v1381 = vadd.f32 %v1305, %v1380
        %v1382 = vpop.f32.mrb[0].mxu0
        %v1383 = vpop.f32.mrb[0].mxu0
        %v1384 = vadd.f32 %v1305, %v1383
        %v1385 = vpop.f32.mrb[0].mxu0
        %1386 = vmatprep.mubr.bf16.mxu0 0
        %1387 = vmatmul.mubr.bf16.gmra.mrb[0].mxu0 %v1292
        %v1388 = vpop.f32.mrb[0].mxu0
        %v1389 = vadd.f32 %v1305, %v1388
        %v1390 = vpop.f32.mrb[0].mxu0
        %v1391 = vpop.f32.mrb[0].mxu0
        %v1392 = vadd.f32 %v1305, %v1391
        %v1393 = vpop.f32.mrb[0].mxu0
        %1394 = vmatprep.mubr.bf16.mxu0 0
        %1395 = vmatmul.mubr.bf16.gmra.mrb[0].mxu0 %v1293
        %v1396 = vpop.f32.mrb[0].mxu0
        %v1397 = vadd.f32 %v1305, %v1396
        %v1398 = vpop.f32.mrb[0].mxu0
        %v1399 = vpop.f32.mrb[0].mxu0
        %v1400 = vadd.f32 %v1305, %v1399
        %v1401 = vpop.f32.mrb[0].mxu0
        %1402 = vmatprep.mubr.bf16.mxu0 0
        %1403 = vmatmul.mubr.bf16.gmra.mrb[0].mxu0 %v1294
        %v1404 = vpop.f32.mrb[0].mxu0
        %v1405 = vadd.f32 %v1305, %v1404
        %v1406 = vpop.f32.mrb[0].mxu0
        %v1407 = vpop.f32.mrb[0].mxu0
        %v1408 = vadd.f32 %v1305, %v1407
        %v1409 = vpop.f32.mrb[0].mxu0
        %1410 = vmatprep.mubr.bf16.mxu0 0
        %1411 = vmatmul.mubr.bf16.gmra.mrb[0].mxu0 %v1295
        %v1412 = vpop.f32.mrb[0].mxu0
        %v1413 = vadd.f32 %v1305, %v1412
        %v1414 = vpop.f32.mrb[0].mxu0
        %v1415 = vpop.f32.mrb[0].mxu0
        %v1416 = vadd.f32 %v1305, %v1415
        %v1417 = vpop.f32.mrb[0].mxu0
        %1418 = vmatprep.mubr.bf16.mxu0 0
        %1419 = vmatmul.mubr.bf16.gmra.mrb[0].mxu0 %v1296
        %v1420 = vpop.f32.mrb[0].mxu0
        %v1421 = vadd.f32 %v1305, %v1420
        %v1422 = vpop.f32.mrb[0].mxu0
        %v1423 = vpop.f32.mrb[0].mxu0
        %v1424 = vadd.f32 %v1305, %v1423
        %v1425 = vpop.f32.mrb[0].mxu0
        %1426 = vmatprep.mubr.bf16.mxu0 0
        %1427 = vmatmul.mubr.bf16.gmra.mrb[0].mxu0 %v1297
        %v1428 = vpop.f32.mrb[0].mxu0
        %v1429 = vadd.f32 %v1305, %v1428
        %v1430 = vpop.f32.mrb[0].mxu0
        %v1431 = vpop.f32.mrb[0].mxu0
        %v1432 = vadd.f32 %v1305, %v1431
        %v1433 = vpop.f32.mrb[0].mxu0
        %1434 = vmatprep.mubr.bf16.mxu0 0
        %1435 = vmatmul.mubr.bf16.gmra.mrb[0].mxu0 %v1298
        %v1436 = vpop.f32.mrb[0].mxu0
        %v1437 = vadd.f32 %v1305, %v1436
        %v1438 = vpop.f32.mrb[0].mxu0
        %v1439 = vpop.f32.mrb[0].mxu0
        %v1440 = vadd.f32 %v1305, %v1439
        %v1441 = vpop.f32.mrb[0].mxu0
        %1442 = vmatprep.mubr.bf16.mxu0 0
        %1443 = vmatmul.mubr.bf16.gmra.mrb[0].mxu0 %v1299
        %v1444 = vpop.f32.mrb[0].mxu0
        %v1445 = vadd.f32 %v1305, %v1444
        %v1446 = vpop.f32.mrb[0].mxu0
        %v1447 = vpop.f32.mrb[0].mxu0
        %v1448 = vadd.f32 %v1305, %v1447
        %v1449 = vpop.f32.mrb[0].mxu0
        %1450 = vmatprep.mubr.bf16.mxu0 0
        %1451 = vmatmul.mubr.bf16.gmra.mrb[0].mxu0 %v1300
        %v1452 = vpop.f32.mrb[0].mxu0
        %v1453 = vadd.f32 %v1305, %v1452
        %v1454 = vpop.f32.mrb[0].mxu0
        %v1455 = vpop.f32.mrb[0].mxu0
        %v1456 = vadd.f32 %v1305, %v1455
        %v1457 = vpop.f32.mrb[0].mxu0
        %1458 = vmatprep.mubr.bf16.mxu0 0
        %1459 = vmatmul.mubr.bf16.gmra.mrb[0].mxu0 %v1301
        %v1460 = vpop.f32.mrb[0].mxu0
        %v1461 = vadd.f32 %v1305, %v1460
        %v1462 = vpop.f32.mrb[0].mxu0
        %v1463 = vpop.f32.mrb[0].mxu0
        %v1464 = vadd.f32 %v1305, %v1463
        %v1465 = vpop.f32.mrb[0].mxu0
        %1466 = vdwg.mxu0
        %v1467 = vtanh.pop %v1341
        %v1468 = vtanh.pop %v1344
        %v1469 = vtanh.pop %v1349
        %v1470 = vtanh.pop %v1352
        %v1471 = vtanh.pop %v1357
        %v1472 = vtanh.pop %v1360
        %v1473 = vtanh.pop %v1365
        %v1474 = vtanh.pop %v1368
        %v1475 = vtanh.pop %v1373
        %v1476 = vtanh.pop %v1376
        %v1477 = vtanh.pop %v1381
        %v1478 = vtanh.pop %v1384
        %v1479 = vtanh.pop %v1389
        %v1480 = vtanh.pop %v1392
        %v1481 = vtanh.pop %v1397
        %v1482 = vtanh.pop %v1400
        %v1483 = vtanh.pop %v1405
        %v1484 = vtanh.pop %v1408
        %v1485 = vtanh.pop %v1413
        %v1486 = vtanh.pop %v1416
        %v1487 = vtanh.pop %v1421
        %v1488 = vtanh.pop %v1424
        %v1489 = vtanh.pop %v1429
        %v1490 = vtanh.pop %v1432
        %v1491 = vtanh.pop %v1437
        %v1492 = vtanh.pop %v1440
        %v1493 = vtanh.pop %v1445
        %v1494 = vtanh.pop %v1448
        %v1495 = vtanh.pop %v1453
        %v1496 = vtanh.pop %v1456
        %v1497 = vtanh.pop %v1461
        %v1498 = vtanh.pop %v1464
        %v1499 = vpack.c.bf16 %v1468, %v1467
        %v1500 = vpack.c.bf16 %v1470, %v1469
        %v1501 = vpack.c.bf16 %v1472, %v1471
        %v1502 = vpack.c.bf16 %v1474, %v1473
        %v1503 = vpack.c.bf16 %v1476, %v1475
        %v1504 = vpack.c.bf16 %v1478, %v1477
        %v1505 = vpack.c.bf16 %v1480, %v1479
        %v1506 = vpack.c.bf16 %v1482, %v1481
        %v1507 = vpack.c.bf16 %v1484, %v1483
        %v1508 = vpack.c.bf16 %v1486, %v1485
        %v1509 = vpack.c.bf16 %v1488, %v1487
        %v1510 = vpack.c.bf16 %v1490, %v1489
        %v1511 = vpack.c.bf16 %v1492, %v1491
        %v1512 = vpack.c.bf16 %v1494, %v1493
        %v1513 = vpack.c.bf16 %v1496, %v1495
        %v1514 = vpack.c.bf16 %v1498, %v1497
        %1515 = vmatprep.subr.bf16.mxu0 0
        %1516 = vmatpush1.bf16.msra.mxu0 %v875
        %1517 = vmatprep.subr.bf16.mxu0 0
        %1518 = vmatpush1.bf16.msra.mxu0 %v876
        %1519 = vmatprep.subr.bf16.mxu0 0
        %1520 = vmatpush1.bf16.msra.mxu0 %v877
        %1521 = vmatprep.subr.bf16.mxu0 0
        %1522 = vmatpush1.bf16.msra.mxu0 %v878
        %1523 = vmatprep.subr.bf16.mxu0 0
        %1524 = vmatpush1.bf16.msra.mxu0 %v879
        %1525 = vmatprep.subr.bf16.mxu0 0
        %1526 = vmatpush1.bf16.msra.mxu0 %v880
        %1527 = vmatprep.subr.bf16.mxu0 0
        %1528 = vmatpush1.bf16.msra.mxu0 %v881
        %1529 = vmatprep.subr.bf16.mxu0 0
        %1530 = vmatpush1.bf16.msra.mxu0 %v882
        %1531 = vmatprep.subr.bf16.mxu0 0
        %1532 = vmatpush1.bf16.msra.mxu0 0
        %1533 = vmatprep.subr.bf16.mxu0 0
        %1534 = vmatpush1.bf16.msra.mxu0 0
        %1535 = vmatprep.subr.bf16.mxu0 0
        %1536 = vmatpush1.bf16.msra.mxu0 0
        %1537 = vmatprep.subr.bf16.mxu0 0
        %1538 = vmatpush1.bf16.msra.mxu0 0
        %1539 = vmatprep.subr.bf16.mxu0 0
        %1540 = vmatpush1.bf16.msra.mxu0 0
        %1541 = vmatprep.subr.bf16.mxu0 0
        %1542 = vmatpush1.bf16.msra.mxu0 0
        %1543 = vmatprep.subr.bf16.mxu0 0
        %1544 = vmatpush1.bf16.msra.mxu0 0
        %1545 = vmatprep.subr.bf16.mxu0 0
        %1546 = vmatpush1.bf16.msra.mxu0 0
        %1547 = vmatprep.mubr.bf16.mxu0 0
        %1548 = vmatmul.mubr.bf16.gmra.mrb[0].mxu0 %v1499
        %v1549 = vpop.f32.mrb[0].mxu0
        %v1550 = vadd.f32 %v841, %v1549
        %v1551 = vpop.f32.mrb[0].mxu0
        %v1552 = vpop.f32.mrb[0].mxu0
        %v1553 = vadd.f32 %v841, %v1552
        %v1554 = vpop.f32.mrb[0].mxu0
        %1555 = vmatprep.mubr.bf16.mxu0 0
        %1556 = vmatmul.mubr.bf16.gmra.mrb[0].mxu0 %v1500
        %v1557 = vpop.f32.mrb[0].mxu0
        %v1558 = vadd.f32 %v841, %v1557
        %v1559 = vpop.f32.mrb[0].mxu0
        %v1560 = vpop.f32.mrb[0].mxu0
        %v1561 = vadd.f32 %v841, %v1560
        %v1562 = vpop.f32.mrb[0].mxu0
        %1563 = vmatprep.mubr.bf16.mxu0 0
        %1564 = vmatmul.mubr.bf16.gmra.mrb[0].mxu0 %v1501
        %v1565 = vpop.f32.mrb[0].mxu0
        %v1566 = vadd.f32 %v841, %v1565
        %v1567 = vpop.f32.mrb[0].mxu0
        %v1568 = vpop.f32.mrb[0].mxu0
        %v1569 = vadd.f32 %v841, %v1568
        %v1570 = vpop.f32.mrb[0].mxu0
        %1571 = vmatprep.mubr.bf16.mxu0 0
        %1572 = vmatmul.mubr.bf16.gmra.mrb[0].mxu0 %v1502
        %v1573 = vpop.f32.mrb[0].mxu0
        %v1574 = vadd.f32 %v841, %v1573
        %v1575 = vpop.f32.mrb[0].mxu0
        %v1576 = vpop.f32.mrb[0].mxu0
        %v1577 = vadd.f32 %v841, %v1576
        %v1578 = vpop.f32.mrb[0].mxu0
        %1579 = vmatprep.mubr.bf16.mxu0 0
        %1580 = vmatmul.mubr.bf16.gmra.mrb[0].mxu0 %v1503
        %v1581 = vpop.f32.mrb[0].mxu0
        %v1582 = vadd.f32 %v841, %v1581
        %v1583 = vpop.f32.mrb[0].mxu0
        %v1584 = vpop.f32.mrb[0].mxu0
        %v1585 = vadd.f32 %v841, %v1584
        %v1586 = vpop.f32.mrb[0].mxu0
        %1587 = vmatprep.mubr.bf16.mxu0 0
        %1588 = vmatmul.mubr.bf16.gmra.mrb[0].mxu0 %v1504
        %v1589 = vpop.f32.mrb[0].mxu0
        %v1590 = vadd.f32 %v841, %v1589
        %v1591 = vpop.f32.mrb[0].mxu0
        %v1592 = vpop.f32.mrb[0].mxu0
        %v1593 = vadd.f32 %v841, %v1592
        %v1594 = vpop.f32.mrb[0].mxu0
        %1595 = vmatprep.mubr.bf16.mxu0 0
        %1596 = vmatmul.mubr.bf16.gmra.mrb[0].mxu0 %v1505
        %v1597 = vpop.f32.mrb[0].mxu0
        %v1598 = vadd.f32 %v841, %v1597
        %v1599 = vpop.f32.mrb[0].mxu0
        %v1600 = vpop.f32.mrb[0].mxu0
        %v1601 = vadd.f32 %v841, %v1600
        %v1602 = vpop.f32.mrb[0].mxu0
        %1603 = vmatprep.mubr.bf16.mxu0 0
        %1604 = vmatmul.mubr.bf16.gmra.mrb[0].mxu0 %v1506
        %v1605 = vpop.f32.mrb[0].mxu0
        %v1606 = vadd.f32 %v841, %v1605
        %v1607 = vpop.f32.mrb[0].mxu0
        %v1608 = vpop.f32.mrb[0].mxu0
        %v1609 = vadd.f32 %v841, %v1608
        %v1610 = vpop.f32.mrb[0].mxu0
        %1611 = vmatprep.mubr.bf16.mxu0 0
        %1612 = vmatmul.mubr.bf16.gmra.mrb[0].mxu0 %v1507
        %v1613 = vpop.f32.mrb[0].mxu0
        %v1614 = vadd.f32 %v841, %v1613
        %v1615 = vpop.f32.mrb[0].mxu0
        %v1616 = vpop.f32.mrb[0].mxu0
        %v1617 = vadd.f32 %v841, %v1616
        %v1618 = vpop.f32.mrb[0].mxu0
        %1619 = vmatprep.mubr.bf16.mxu0 0
        %1620 = vmatmul.mubr.bf16.gmra.mrb[0].mxu0 %v1508
        %v1621 = vpop.f32.mrb[0].mxu0
        %v1622 = vadd.f32 %v841, %v1621
        %v1623 = vpop.f32.mrb[0].mxu0
        %v1624 = vpop.f32.mrb[0].mxu0
        %v1625 = vadd.f32 %v841, %v1624
        %v1626 = vpop.f32.mrb[0].mxu0
        %1627 = vmatprep.mubr.bf16.mxu0 0
        %1628 = vmatmul.mubr.bf16.gmra.mrb[0].mxu0 %v1509
        %v1629 = vpop.f32.mrb[0].mxu0
        %v1630 = vadd.f32 %v841, %v1629
        %v1631 = vpop.f32.mrb[0].mxu0
        %v1632 = vpop.f32.mrb[0].mxu0
        %v1633 = vadd.f32 %v841, %v1632
        %v1634 = vpop.f32.mrb[0].mxu0
        %1635 = vmatprep.mubr.bf16.mxu0 0
        %1636 = vmatmul.mubr.bf16.gmra.mrb[0].mxu0 %v1510
        %v1637 = vpop.f32.mrb[0].mxu0
        %v1638 = vadd.f32 %v841, %v1637
        %v1639 = vpop.f32.mrb[0].mxu0
        %v1640 = vpop.f32.mrb[0].mxu0
        %v1641 = vadd.f32 %v841, %v1640
        %v1642 = vpop.f32.mrb[0].mxu0
        %1643 = vmatprep.mubr.bf16.mxu0 0
        %1644 = vmatmul.mubr.bf16.gmra.mrb[0].mxu0 %v1511
        %v1645 = vpop.f32.mrb[0].mxu0
        %v1646 = vadd.f32 %v841, %v1645
        %v1647 = vpop.f32.mrb[0].mxu0
        %v1648 = vpop.f32.mrb[0].mxu0
        %v1649 = vadd.f32 %v841, %v1648
        %v1650 = vpop.f32.mrb[0].mxu0
        %1651 = vmatprep.mubr.bf16.mxu0 0
        %1652 = vmatmul.mubr.bf16.gmra.mrb[0].mxu0 %v1512
        %v1653 = vpop.f32.mrb[0].mxu0
        %v1654 = vadd.f32 %v841, %v1653
        %v1655 = vpop.f32.mrb[0].mxu0
        %v1656 = vpop.f32.mrb[0].mxu0
        %v1657 = vadd.f32 %v841, %v1656
        %v1658 = vpop.f32.mrb[0].mxu0
        %1659 = vmatprep.mubr.bf16.mxu0 0
        %1660 = vmatmul.mubr.bf16.gmra.mrb[0].mxu0 %v1513
        %v1661 = vpop.f32.mrb[0].mxu0
        %v1662 = vadd.f32 %v841, %v1661
        %v1663 = vpop.f32.mrb[0].mxu0
        %v1664 = vpop.f32.mrb[0].mxu0
        %v1665 = vadd.f32 %v841, %v1664
        %v1666 = vpop.f32.mrb[0].mxu0
        %1667 = vmatprep.mubr.bf16.mxu0 0
        %1668 = vmatmul.mubr.bf16.gmra.mrb[0].mxu0 %v1514
        %v1669 = vpop.f32.mrb[0].mxu0
        %v1670 = vadd.f32 %v841, %v1669
        %v1671 = vpop.f32.mrb[0].mxu0
        %v1672 = vpop.f32.mrb[0].mxu0
        %v1673 = vadd.f32 %v841, %v1672
        %v1674 = vpop.f32.mrb[0].mxu0
        %1675 = vdwg.mxu0
        %v1676 = vstv %s1248
        %v1677 = vmul.f32 %v1676, %v1215
        %v1678 = vmul.f32 %v1676, %v1216
        %v1679 = vmul.f32 %v1676, %v1217
        %v1680 = vmul.f32 %v1676, %v1218
        %v1681 = vmul.f32 %v1676, %v1219
        %v1682 = vmul.f32 %v1676, %v1220
        %v1683 = vmul.f32 %v1676, %v1221
        %v1684 = vmul.f32 %v1676, %v1222
        %v1685 = vmul.f32 %v1676, %v1223
        %v1686 = vmul.f32 %v1676, %v1224
        %v1687 = vmul.f32 %v1676, %v1225
        %v1688 = vmul.f32 %v1676, %v1226
        %v1689 = vmul.f32 %v1676, %v1227
        %v1690 = vmul.f32 %v1676, %v1228
        %v1691 = vmul.f32 %v1676, %v1229
        %v1692 = vmul.f32 %v1676, %v1230
        %v1693 = vmul.f32 %v1676, %v1231
        %v1694 = vmul.f32 %v1676, %v1232
        %v1695 = vmul.f32 %v1676, %v1233
        %v1696 = vmul.f32 %v1676, %v1234
        %v1697 = vmul.f32 %v1676, %v1235
        %v1698 = vmul.f32 %v1676, %v1236
        %v1699 = vmul.f32 %v1676, %v1237
        %v1700 = vmul.f32 %v1676, %v1238
        %v1701 = vmul.f32 %v1676, %v1239
        %v1702 = vmul.f32 %v1676, %v1240
        %v1703 = vmul.f32 %v1676, %v1241
        %v1704 = vmul.f32 %v1676, %v1242
        %v1705 = vmul.f32 %v1676, %v1243
        %v1706 = vmul.f32 %v1676, %v1244
        %v1707 = vmul.f32 %v1676, %v1245
        %v1708 = vmul.f32 %v1676, %v1246
        %v1709 = vstv %s1250
        %v1710 = vmul.f32 %v1709, %v1550
        %v1711 = vmul.f32 %v1709, %v1553
        %v1712 = vmul.f32 %v1709, %v1558
        %v1713 = vmul.f32 %v1709, %v1561
        %v1714 = vmul.f32 %v1709, %v1566
        %v1715 = vmul.f32 %v1709, %v1569
        %v1716 = vmul.f32 %v1709, %v1574
        %v1717 = vmul.f32 %v1709, %v1577
        %v1718 = vmul.f32 %v1709, %v1582
        %v1719 = vmul.f32 %v1709, %v1585
        %v1720 = vmul.f32 %v1709, %v1590
        %v1721 = vmul.f32 %v1709, %v1593
        %v1722 = vmul.f32 %v1709, %v1598
        %v1723 = vmul.f32 %v1709, %v1601
        %v1724 = vmul.f32 %v1709, %v1606
        %v1725 = vmul.f32 %v1709, %v1609
        %v1726 = vmul.f32 %v1709, %v1614
        %v1727 = vmul.f32 %v1709, %v1617
        %v1728 = vmul.f32 %v1709, %v1622
        %v1729 = vmul.f32 %v1709, %v1625
        %v1730 = vmul.f32 %v1709, %v1630
        %v1731 = vmul.f32 %v1709, %v1633
        %v1732 = vmul.f32 %v1709, %v1638
        %v1733 = vmul.f32 %v1709, %v1641
        %v1734 = vmul.f32 %v1709, %v1646
        %v1735 = vmul.f32 %v1709, %v1649
        %v1736 = vmul.f32 %v1709, %v1654
        %v1737 = vmul.f32 %v1709, %v1657
        %v1738 = vmul.f32 %v1709, %v1662
        %v1739 = vmul.f32 %v1709, %v1665
        %v1740 = vmul.f32 %v1709, %v1670
        %v1741 = vmul.f32 %v1709, %v1673
        %v1742 = vadd.f32 %v1677, %v1710
        %v1743 = vadd.f32 %v1678, %v1711
        %v1744 = vadd.f32 %v1679, %v1712
        %v1745 = vadd.f32 %v1680, %v1713
        %v1746 = vadd.f32 %v1681, %v1714
        %v1747 = vadd.f32 %v1682, %v1715
        %v1748 = vadd.f32 %v1683, %v1716
        %v1749 = vadd.f32 %v1684, %v1717
        %v1750 = vadd.f32 %v1685, %v1718
        %v1751 = vadd.f32 %v1686, %v1719
        %v1752 = vadd.f32 %v1687, %v1720
        %v1753 = vadd.f32 %v1688, %v1721
        %v1754 = vadd.f32 %v1689, %v1722
        %v1755 = vadd.f32 %v1690, %v1723
        %v1756 = vadd.f32 %v1691, %v1724
        %v1757 = vadd.f32 %v1692, %v1725
        %v1758 = vadd.f32 %v1693, %v1726
        %v1759 = vadd.f32 %v1694, %v1727
        %v1760 = vadd.f32 %v1695, %v1728
        %v1761 = vadd.f32 %v1696, %v1729
        %v1762 = vadd.f32 %v1697, %v1730
        %v1763 = vadd.f32 %v1698, %v1731
        %v1764 = vadd.f32 %v1699, %v1732
        %v1765 = vadd.f32 %v1700, %v1733
        %v1766 = vadd.f32 %v1701, %v1734
        %v1767 = vadd.f32 %v1702, %v1735
        %v1768 = vadd.f32 %v1703, %v1736
        %v1769 = vadd.f32 %v1704, %v1737
        %v1770 = vadd.f32 %v1705, %v1738
        %v1771 = vadd.f32 %v1706, %v1739
        %v1772 = vadd.f32 %v1707, %v1740
        %v1773 = vadd.f32 %v1708, %v1741
        %v1774 = vsub.f32 %v1215, %v1742
        %v1775 = vsub.f32 %v1216, %v1743
        %v1776 = vsub.f32 %v1217, %v1744
        %v1777 = vsub.f32 %v1218, %v1745
        %v1778 = vsub.f32 %v1219, %v1746
        %v1779 = vsub.f32 %v1220, %v1747
        %v1780 = vsub.f32 %v1221, %v1748
        %v1781 = vsub.f32 %v1222, %v1749
        %v1782 = vsub.f32 %v1223, %v1750
        %v1783 = vsub.f32 %v1224, %v1751
        %v1784 = vsub.f32 %v1225, %v1752
        %v1785 = vsub.f32 %v1226, %v1753
        %v1786 = vsub.f32 %v1227, %v1754
        %v1787 = vsub.f32 %v1228, %v1755
        %v1788 = vsub.f32 %v1229, %v1756
        %v1789 = vsub.f32 %v1230, %v1757
        %v1790 = vsub.f32 %v1231, %v1758
        %v1791 = vsub.f32 %v1232, %v1759
        %v1792 = vsub.f32 %v1233, %v1760
        %v1793 = vsub.f32 %v1234, %v1761
        %v1794 = vsub.f32 %v1235, %v1762
        %v1795 = vsub.f32 %v1236, %v1763
        %v1796 = vsub.f32 %v1237, %v1764
        %v1797 = vsub.f32 %v1238, %v1765
        %v1798 = vsub.f32 %v1239, %v1766
        %v1799 = vsub.f32 %v1240, %v1767
        %v1800 = vsub.f32 %v1241, %v1768
        %v1801 = vsub.f32 %v1242, %v1769
        %v1802 = vsub.f32 %v1243, %v1770
        %v1803 = vsub.f32 %v1244, %v1771
        %v1804 = vsub.f32 %v1245, %v1772
        %v1805 = vsub.f32 %v1246, %v1773
        %v1806 = vstv %s520
        %v1807 = vmul.f32 %v1774, %v1806
        %v1808 = vmul.f32 %v1775, %v1806
        %v1809 = vmul.f32 %v1776, %v1806
        %v1810 = vmul.f32 %v1777, %v1806
        %v1811 = vmul.f32 %v1778, %v1806
        %v1812 = vmul.f32 %v1779, %v1806
        %v1813 = vmul.f32 %v1780, %v1806
        %v1814 = vmul.f32 %v1781, %v1806
        %v1815 = vmul.f32 %v1782, %v1806
        %v1816 = vmul.f32 %v1783, %v1806
        %v1817 = vmul.f32 %v1784, %v1806
        %v1818 = vmul.f32 %v1785, %v1806
        %v1819 = vmul.f32 %v1786, %v1806
        %v1820 = vmul.f32 %v1787, %v1806
        %v1821 = vmul.f32 %v1788, %v1806
        %v1822 = vmul.f32 %v1789, %v1806
        %v1823 = vmul.f32 %v1790, %v1806
        %v1824 = vmul.f32 %v1791, %v1806
        %v1825 = vmul.f32 %v1792, %v1806
        %v1826 = vmul.f32 %v1793, %v1806
        %v1827 = vmul.f32 %v1794, %v1806
        %v1828 = vmul.f32 %v1795, %v1806
        %v1829 = vmul.f32 %v1796, %v1806
        %v1830 = vmul.f32 %v1797, %v1806
        %v1831 = vmul.f32 %v1798, %v1806
        %v1832 = vmul.f32 %v1799, %v1806
        %v1833 = vmul.f32 %v1800, %v1806
        %v1834 = vmul.f32 %v1801, %v1806
        %v1835 = vmul.f32 %v1802, %v1806
        %v1836 = vmul.f32 %v1803, %v1806
        %v1837 = vmul.f32 %v1804, %v1806
        %v1838 = vmul.f32 %v1805, %v1806
        %v1839 = vadd.f32 %v449, %v1807
        %v1840 = vadd.f32 %v450, %v1808
        %v1841 = vadd.f32 %v451, %v1809
        %v1842 = vadd.f32 %v452, %v1810
        %v1843 = vadd.f32 %v453, %v1811
        %v1844 = vadd.f32 %v454, %v1812
        %v1845 = vadd.f32 %v455, %v1813
        %v1846 = vadd.f32 %v456, %v1814
        %v1847 = vadd.f32 %v457, %v1815
        %v1848 = vadd.f32 %v458, %v1816
        %v1849 = vadd.f32 %v459, %v1817
        %v1850 = vadd.f32 %v460, %v1818
        %v1851 = vadd.f32 %v461, %v1819
        %v1852 = vadd.f32 %v462, %v1820
        %v1853 = vadd.f32 %v463, %v1821
        %v1854 = vadd.f32 %v464, %v1822
        %v1855 = vadd.f32 %v465, %v1823
        %v1856 = vadd.f32 %v466, %v1824
        %v1857 = vadd.f32 %v467, %v1825
        %v1858 = vadd.f32 %v468, %v1826
        %v1859 = vadd.f32 %v469, %v1827
        %v1860 = vadd.f32 %v470, %v1828
        %v1861 = vadd.f32 %v471, %v1829
        %v1862 = vadd.f32 %v472, %v1830
        %v1863 = vadd.f32 %v473, %v1831
        %v1864 = vadd.f32 %v474, %v1832
        %v1865 = vadd.f32 %v475, %v1833
        %v1866 = vadd.f32 %v476, %v1834
        %v1867 = vadd.f32 %v477, %v1835
        %v1868 = vadd.f32 %v478, %v1836
        %v1869 = vadd.f32 %v479, %v1837
        %v1870 = vadd.f32 %v480, %v1838
        %v1871 = vld [vmem:[%s327] sm:$0xf]
        %v1872 = vld [vmem:[%s327 + $0x4] sm:$0xf]
        %v1873 = vld [vmem:[%s327 + $0x8] sm:$0xf]
        %v1874 = vld [vmem:[%s327 + $0xc] sm:$0xf]
        %v1875 = vld [vmem:[%s327 + $0x10] sm:$0xf]
        %v1876 = vld [vmem:[%s327 + $0x14] sm:$0xf]
        %v1877 = vld [vmem:[%s327 + $0x18] sm:$0xf]
        %v1878 = vld [vmem:[%s327 + $0x1c] sm:$0xf]
        %v1879 = vld [vmem:[%s327 + $0x20] sm:$0xf]
        %v1880 = vld [vmem:[%s327 + $0x24] sm:$0xf]
        %v1881 = vld [vmem:[%s327 + $0x28] sm:$0xf]
        %v1882 = vld [vmem:[%s327 + $0x2c] sm:$0xf]
        %v1883 = vld [vmem:[%s327 + $0x30] sm:$0xf]
        %v1884 = vld [vmem:[%s327 + $0x34] sm:$0xf]
        %v1885 = vld [vmem:[%s327 + $0x38] sm:$0xf]
        %v1886 = vld [vmem:[%s327 + $0x3c] sm:$0xf]
        %v1887 = vld [vmem:[%s327 + $0x40] sm:$0xf]
        %v1888 = vld [vmem:[%s327 + $0x44] sm:$0xf]
        %v1889 = vld [vmem:[%s327 + $0x48] sm:$0xf]
        %v1890 = vld [vmem:[%s327 + $0x4c] sm:$0xf]
        %v1891 = vld [vmem:[%s327 + $0x50] sm:$0xf]
        %v1892 = vld [vmem:[%s327 + $0x54] sm:$0xf]
        %v1893 = vld [vmem:[%s327 + $0x58] sm:$0xf]
        %v1894 = vld [vmem:[%s327 + $0x5c] sm:$0xf]
        %v1895 = vld [vmem:[%s327 + $0x60] sm:$0xf]
        %v1896 = vld [vmem:[%s327 + $0x64] sm:$0xf]
        %v1897 = vld [vmem:[%s327 + $0x68] sm:$0xf]
        %v1898 = vld [vmem:[%s327 + $0x6c] sm:$0xf]
        %v1899 = vld [vmem:[%s327 + $0x70] sm:$0xf]
        %v1900 = vld [vmem:[%s327 + $0x74] sm:$0xf]
        %v1901 = vld [vmem:[%s327 + $0x78] sm:$0xf]
        %v1902 = vld [vmem:[%s327 + $0x7c] sm:$0xf]
        %v1903 = vunpack.c.l.bf16 %v1871
        %v1904 = vunpack.c.l.bf16 %v1872
        %v1905 = vunpack.c.l.bf16 %v1873
        %v1906 = vunpack.c.l.bf16 %v1874
        %v1907 = vunpack.c.l.bf16 %v1875
        %v1908 = vunpack.c.l.bf16 %v1876
        %v1909 = vunpack.c.l.bf16 %v1877
        %v1910 = vunpack.c.l.bf16 %v1878
        %v1911 = vunpack.c.l.bf16 %v1879
        %v1912 = vunpack.c.l.bf16 %v1880
        %v1913 = vunpack.c.l.bf16 %v1881
        %v1914 = vunpack.c.l.bf16 %v1882
        %v1915 = vunpack.c.l.bf16 %v1883
        %v1916 = vunpack.c.l.bf16 %v1884
        %v1917 = vunpack.c.l.bf16 %v1885
        %v1918 = vunpack.c.l.bf16 %v1886
        %v1919 = vunpack.c.l.bf16 %v1887
        %v1920 = vunpack.c.l.bf16 %v1888
        %v1921 = vunpack.c.l.bf16 %v1889
        %v1922 = vunpack.c.l.bf16 %v1890
        %v1923 = vunpack.c.l.bf16 %v1891
        %v1924 = vunpack.c.l.bf16 %v1892
        %v1925 = vunpack.c.l.bf16 %v1893
        %v1926 = vunpack.c.l.bf16 %v1894
        %v1927 = vunpack.c.l.bf16 %v1895
        %v1928 = vunpack.c.l.bf16 %v1896
        %v1929 = vunpack.c.l.bf16 %v1897
        %v1930 = vunpack.c.l.bf16 %v1898
        %v1931 = vunpack.c.l.bf16 %v1899
        %v1932 = vunpack.c.l.bf16 %v1900
        %v1933 = vunpack.c.l.bf16 %v1901
        %v1934 = vunpack.c.l.bf16 %v1902
        %v1935 = vstv %s516
        %v1936 = vmul.f32 %v1903, %v1935
        %v1937 = vmul.f32 %v1904, %v1935
        %v1938 = vmul.f32 %v1905, %v1935
        %v1939 = vmul.f32 %v1906, %v1935
        %v1940 = vmul.f32 %v1907, %v1935
        %v1941 = vmul.f32 %v1908, %v1935
        %v1942 = vmul.f32 %v1909, %v1935
        %v1943 = vmul.f32 %v1910, %v1935
        %v1944 = vmul.f32 %v1911, %v1935
        %v1945 = vmul.f32 %v1912, %v1935
        %v1946 = vmul.f32 %v1913, %v1935
        %v1947 = vmul.f32 %v1914, %v1935
        %v1948 = vmul.f32 %v1915, %v1935
        %v1949 = vmul.f32 %v1916, %v1935
        %v1950 = vmul.f32 %v1917, %v1935
        %v1951 = vmul.f32 %v1918, %v1935
        %v1952 = vmul.f32 %v1919, %v1935
        %v1953 = vmul.f32 %v1920, %v1935
        %v1954 = vmul.f32 %v1921, %v1935
        %v1955 = vmul.f32 %v1922, %v1935
        %v1956 = vmul.f32 %v1923, %v1935
        %v1957 = vmul.f32 %v1924, %v1935
        %v1958 = vmul.f32 %v1925, %v1935
        %v1959 = vmul.f32 %v1926, %v1935
        %v1960 = vmul.f32 %v1927, %v1935
        %v1961 = vmul.f32 %v1928, %v1935
        %v1962 = vmul.f32 %v1929, %v1935
        %v1963 = vmul.f32 %v1930, %v1935
        %v1964 = vmul.f32 %v1931, %v1935
        %v1965 = vmul.f32 %v1932, %v1935
        %v1966 = vmul.f32 %v1933, %v1935
        %v1967 = vmul.f32 %v1934, %v1935
        %v1968 = vadd.f32 %v1839, %v1936
        %v1969 = vadd.f32 %v1840, %v1937
        %v1970 = vadd.f32 %v1841, %v1938
        %v1971 = vadd.f32 %v1842, %v1939
        %v1972 = vadd.f32 %v1843, %v1940
        %v1973 = vadd.f32 %v1844, %v1941
        %v1974 = vadd.f32 %v1845, %v1942
        %v1975 = vadd.f32 %v1846, %v1943
        %v1976 = vadd.f32 %v1847, %v1944
        %v1977 = vadd.f32 %v1848, %v1945
        %v1978 = vadd.f32 %v1849, %v1946
        %v1979 = vadd.f32 %v1850, %v1947
        %v1980 = vadd.f32 %v1851, %v1948
        %v1981 = vadd.f32 %v1852, %v1949
        %v1982 = vadd.f32 %v1853, %v1950
        %v1983 = vadd.f32 %v1854, %v1951
        %v1984 = vadd.f32 %v1855, %v1952
        %v1985 = vadd.f32 %v1856, %v1953
        %v1986 = vadd.f32 %v1857, %v1954
        %v1987 = vadd.f32 %v1858, %v1955
        %v1988 = vadd.f32 %v1859, %v1956
        %v1989 = vadd.f32 %v1860, %v1957
        %v1990 = vadd.f32 %v1861, %v1958
        %v1991 = vadd.f32 %v1862, %v1959
        %v1992 = vadd.f32 %v1863, %v1960
        %v1993 = vadd.f32 %v1864, %v1961
        %v1994 = vadd.f32 %v1865, %v1962
        %v1995 = vadd.f32 %v1866, %v1963
        %v1996 = vadd.f32 %v1867, %v1964
        %v1997 = vadd.f32 %v1868, %v1965
        %v1998 = vadd.f32 %v1869, %v1966
        %v1999 = vadd.f32 %v1870, %v1967
        %2000 = vst [vmem:[%s372] sm:$0xff] %v1968
        %2001 = vst [vmem:[%s372 + $0x8] sm:$0xff] %v1969
        %2002 = vst [vmem:[%s372 + $0x10] sm:$0xff] %v1970
        %2003 = vst [vmem:[%s372 + $0x18] sm:$0xff] %v1971
        %2004 = vst [vmem:[%s372 + $0x20] sm:$0xff] %v1972
        %2005 = vst [vmem:[%s372 + $0x28] sm:$0xff] %v1973
        %2006 = vst [vmem:[%s372 + $0x30] sm:$0xff] %v1974
        %2007 = vst [vmem:[%s372 + $0x38] sm:$0xff] %v1975
        %2008 = vst [vmem:[%s372 + $0x40] sm:$0xff] %v1976
        %2009 = vst [vmem:[%s372 + $0x48] sm:$0xff] %v1977
        %2010 = vst [vmem:[%s372 + $0x50] sm:$0xff] %v1978
        %2011 = vst [vmem:[%s372 + $0x58] sm:$0xff] %v1979
        %2012 = vst [vmem:[%s372 + $0x60] sm:$0xff] %v1980
        %2013 = vst [vmem:[%s372 + $0x68] sm:$0xff] %v1981
        %2014 = vst [vmem:[%s372 + $0x70] sm:$0xff] %v1982
        %2015 = vst [vmem:[%s372 + $0x78] sm:$0xff] %v1983
        %2016 = vst [vmem:[%s372 + $0x80] sm:$0xff] %v1984
        %2017 = vst [vmem:[%s372 + $0x88] sm:$0xff] %v1985
        %2018 = vst [vmem:[%s372 + $0x90] sm:$0xff] %v1986
        %2019 = vst [vmem:[%s372 + $0x98] sm:$0xff] %v1987
        %2020 = vst [vmem:[%s372 + $0xa0] sm:$0xff] %v1988
        %2021 = vst [vmem:[%s372 + $0xa8] sm:$0xff] %v1989
        %2022 = vst [vmem:[%s372 + $0xb0] sm:$0xff] %v1990
        %2023 = vst [vmem:[%s372 + $0xb8] sm:$0xff] %v1991
        %2024 = vst [vmem:[%s372 + $0xc0] sm:$0xff] %v1992
        %2025 = vst [vmem:[%s372 + $0xc8] sm:$0xff] %v1993
        %2026 = vst [vmem:[%s372 + $0xd0] sm:$0xff] %v1994
        %2027 = vst [vmem:[%s372 + $0xd8] sm:$0xff] %v1995
        %2028 = vst [vmem:[%s372 + $0xe0] sm:$0xff] %v1996
        %2029 = vst [vmem:[%s372 + $0xe8] sm:$0xff] %v1997
        %2030 = vst [vmem:[%s372 + $0xf0] sm:$0xff] %v1998
        %2031 = vst [vmem:[%s372 + $0xf8] sm:$0xff] %v1999
        %s2032 = sand.u32 %s195, 1
        %s2033 = scalar_lea.sflag [#allocation6], %s2032
        %s2034 = sand.u32 %s195, 1
        %s2035 = smul.addr %s2034, 256
        %s2036 = scalar_lea.vmem [#allocation12], %s2035
        // Predicated region
        $region65: #{tpu_custom_call.1} parent=43 // pred_check
          %p2037 = pneg %p205
        $region66: #{tpu_custom_call.1} parent=43 // pred_check_branch
          %2039 = sbr.rel (%p2037) target = $region68
        $region67: #{tpu_custom_call.1} parent=43 // pred_region
          %s2040 = smul.u32 32, %s36
          %s2042 = ssub.s32 4096, 4096
          %2043 = vsyncadd %s2033, %s2042
          %s2044 = smul.addr %s2040, 128
          %s2045 = scalar_lea.hbm %s7, %s2044
          %s2046 = sshll.u32 %s2036, 4
          %s2047 = int_to_ptr.vmem [resolvable:$true] %s2046
          %2052 = dma.vmem_to_hbm [thread:$0]  %s2047, 4096, %s2045, %s2033, 128, 128, 8
        $region68: #{tpu_custom_call.1} parent=43 // pred_fallthru
          _
      $region44: #{tpu_custom_call.1} parent=5 // pred_fallthru
        _
      %p2053 = scmp.le.s32.totalorder 2, %s27
      // Predicated region
      $region69: #{tpu_custom_call.1} parent=5 // pred_check
        %p2054 = pneg %p2053
      $region70: #{tpu_custom_call.1} parent=5 // pred_check_branch
        %2056 = sbr.rel (%p2054) target = $region72
      $region71: #{tpu_custom_call.1} parent=5 // pred_region
        %s2057 = ssub.s32 %s27, 2
        // Predicated region
        $region73: #{tpu_custom_call.1} parent=71 // pred_check
          %p2058 = pneg %p211
        $region74: #{tpu_custom_call.1} parent=71 // pred_check_branch
          %2060 = sbr.rel (%p2058) target = $region76
        $region75: #{tpu_custom_call.1} parent=71 // pred_region
          %s2061 = sand.u32 %s196, 1
          %s2062 = scalar_lea.sflag [#allocation6], %s2061
          %s2063 = sand.u32 %s196, 1
          %s2064 = smul.addr %s2063, 256
          %s2065 = scalar_lea.vmem [#allocation12], %s2064
          %2066 = dma.done %s2062, 4096
        $region76: #{tpu_custom_call.1} parent=71 // pred_fallthru
          _
      $region72: #{tpu_custom_call.1} parent=5 // pred_fallthru
        _
    $region6: #{tpu_custom_call.1} parent=1 // loop_footer
      %s31 = sadd.s32 1, %s27
    $region7: #{tpu_custom_call.1} parent=1 // loop_footer_branch
      %26 = sbr.rel target = $region3
    $region8: #{tpu_custom_call.1} parent=1 // loop_exit
      _
    %2067 = vsyncpa [#allocation5], 1
    %s2068 = scalar_lea.sflag [#allocation5], 1
    %2069 = vsyncpa %s2068, 1
    %2070 = vsyncpa [#allocation8], 1
    %s2071 = scalar_lea.sflag [#allocation8], 1
    %2072 = vsyncpa %s2071, 1
    %2073 = vsyncpa [#allocation11], 1
    %2074 = vsyncpa [#allocation6], 1
    %s2075 = scalar_lea.sflag [#allocation6], 1
    %2076 = vsyncpa %s2075, 1

</llo_original>
